<compile_context>
chip_gen: v7x
topology: tpu7x:2x2x1
jax: 0.10.0
libtpu: 0.0.40
codegen_flags: <defaults>
</compile_context>

<pallas_src>
import functools
import math

import jax
import jax.numpy as jnp
from jax import lax
from jax.experimental import pallas as pl
from jax.experimental.pallas import tpu as pltpu


def _mha_kernel(q_ref, k_ref, v_ref, wqt_ref, bq_ref, wot_ref, bo_ref, o_ref,
                x_scr, qkv_scr, ctx_scr,
                *, nhead, batch_block, seq_len, compute_dtype):
    """One grid step = one block of batches. Everything lives in VMEM."""
    BB, S = batch_block, seq_len
    D = q_ref.shape[-1]
    dk = D // nhead
    n = BB * S
    inv_scale = 1.0 / math.sqrt(dk)
    cdt = compute_dtype
    f32 = jnp.float32

    # ---- stage fused-GEMM LHS in a compute-dtype scratch (no value concat) --
    # The reference module applies linear_q to query, key AND value, so one
    # (3n, D) @ (D, D) GEMM covers all three projections of the block.
    x_scr[pl.ds(0 * n, n), :] = q_ref[...].reshape(n, D).astype(cdt)
    x_scr[pl.ds(1 * n, n), :] = k_ref[...].reshape(n, D).astype(cdt)
    x_scr[pl.ds(2 * n, n), :] = v_ref[...].reshape(n, D).astype(cdt)

    # ---- fused Q/K/V projection: bf16 MXU operands, f32 accumulation -------
    proj = jnp.dot(x_scr[...], wqt_ref[...], preferred_element_type=f32)
    proj = proj + bq_ref[...]                      # bias add in f32 (VPU)
    # Fold 1/sqrt(dk) into the q rows (rows [0, n)) before the down-cast.
    row = lax.broadcasted_iota(jnp.int32, (3 * n, 1), 0)
    scale = jnp.where(row < n, f32(inv_scale), f32(1.0))
    qkv_scr[...] = (proj * scale).astype(cdt)

    # ---- unmasked scaled-dot-product attention, per batch / per head -------
    dn = (((1,), (1,)), ((), ()))                  # contract last dims
    for b in range(BB):                            # small static loops
        base = b * S
        for h in range(nhead):
            lo, hi = h * dk, (h + 1) * dk
            qh = qkv_scr[pl.ds(0 * n + base, S), lo:hi]   # bf16 views
            kh = qkv_scr[pl.ds(1 * n + base, S), lo:hi]
            vh = qkv_scr[pl.ds(2 * n + base, S), lo:hi]
            scores = lax.dot_general(qh, kh, dn, preferred_element_type=f32)
            m = jnp.max(scores, axis=-1, keepdims=True)
            p = jnp.exp(scores - m)
            l = jnp.sum(p, axis=-1, keepdims=True)
            attn = p * pl.reciprocal(l, approx=True)      # EUP reciprocal
            ctx = jnp.dot(attn.astype(cdt), vh, preferred_element_type=f32)
            ctx_scr[pl.ds(base, S), lo:hi] = ctx.astype(cdt)

    # ---- output projection (dropout = identity in eval mode) ---------------
    out = jnp.dot(ctx_scr[...], wot_ref[...], preferred_element_type=f32)
    out = out + bo_ref[...]
    o_ref[...] = out.reshape(BB, S, D).astype(o_ref.dtype)


def _default_batch_block(B):
    """Largest divisor of B that still leaves >= 2 grid steps, so both v7x
    TensorCores get work on the "parallel" axis.  (On v5e/v6e the extra grid
    step only costs ~0.35us; at larger B*S prefer filling the 256-wide MXU M
    dimension first.)"""
    if B <= 1:
        return max(B, 1)
    bb = 1
    for d in range(1, B // 2 + 1):
        if B % d == 0:
            bb = d
    return bb


def _vmem_limit_bytes():
    """Generation-aware scoped-VMEM limit: ~75% of physical, capped at 100MiB
    (=> ~96 MiB on 128 MiB v5e/v6e parts, ~48 MiB on 64 MiB v7x)."""
    phys = 128 * 1024 * 1024
    try:
        phys = int(getattr(pltpu.get_tpu_info(), "vmem_capacity_bytes", phys))
    except Exception:
        pass
    return min(int(phys * 0.75), 100 * 1024 * 1024)


def multi_head_attention(query, key, value, wq, bq, wo, bo, *,
                         nhead=1, batch_block=None,
                         compute_dtype=jnp.bfloat16):
    """query/key/value: (B, S, D). wq/wo: (D, D) torch layout (out, in).
    bq/bo: (1, D)."""
    B, S, D = query.shape
    assert D % nhead == 0
    assert S % 8 == 0, "pad S to a multiple of 8 (layout-free reshapes)"
    assert D % 128 == 0, "d_model must be lane-dense (multiple of 128)"

    if batch_block is None:
        batch_block = _default_batch_block(B)
    assert B % batch_block == 0, "batch_block must divide B (no partial block)"
    nb = B // batch_block
    n = batch_block * S

    # Pre-transpose + pre-cast the nn.Linear weights ONCE in the wrapper; the
    # kernel consumes (in, out) bf16 tiles directly on the MXU.
    wq_t = jnp.asarray(wq).T.astype(compute_dtype)
    wo_t = jnp.asarray(wo).T.astype(compute_dtype)
    bq = jnp.asarray(bq, jnp.float32)
    bo = jnp.asarray(bo, jnp.float32)

    kernel = functools.partial(_mha_kernel, nhead=nhead,
                               batch_block=batch_block, seq_len=S,
                               compute_dtype=compute_dtype)

    act_spec = pl.BlockSpec((batch_block, S, D), lambda b: (b, 0, 0))
    # Weights/biases: constant index_map -> Pallas only DMAs them once.
    w_spec = pl.BlockSpec((D, D), lambda b: (0, 0))
    b_spec = pl.BlockSpec((1, D), lambda b: (0, 0))

    dk = D // nhead
    flops = (2 * 3 * B * S * D * D          # fused QKV projection
             + 2 * B * S * D * D            # output projection
             + 4 * B * nhead * S * S * dk)  # scores + attn @ V
    transcendentals = B * nhead * S * (S + 1)   # exp + reciprocal
    bytes_accessed = (4 * 4 * B * S * D         # f32 activations in/out
                      + 2 * (2 * D * D) + 4 * 2 * D)

    return pl.pallas_call(
        kernel,
        out_shape=jax.ShapeDtypeStruct((B, S, D), query.dtype),
        grid_spec=pltpu.PrefetchScalarGridSpec(
            num_scalar_prefetch=0,
            grid=(nb,),
            in_specs=[act_spec, act_spec, act_spec,
                      w_spec, b_spec, w_spec, b_spec],
            out_specs=act_spec,
            scratch_shapes=[
                pltpu.VMEM((3 * n, D), compute_dtype),   # fused-GEMM LHS
                pltpu.VMEM((3 * n, D), compute_dtype),   # projected q/k/v
                pltpu.VMEM((n, D), compute_dtype),       # context
            ],
        ),
        compiler_params=pltpu.CompilerParams(
            dimension_semantics=("parallel",),
            vmem_limit_bytes=_vmem_limit_bytes()),
        cost_estimate=pl.CostEstimate(flops=flops,
                                      transcendentals=transcendentals,
                                      bytes_accessed=bytes_accessed),
    )(query, key, value, wq_t, bq, wo_t, bo)


def _reference(query, key, value, wq, bq, wo, bo, nhead):
    """Plain-JAX f32 mirror of the PyTorch module (eval mode)."""
    B, S, D = query.shape
    dk = D // nhead
    proj = lambda x: x @ wq.T + bq          # linear_q used for q, k, v
    q = proj(query).reshape(B, S, nhead, dk).transpose(0, 2, 1, 3)
    k = proj(key).reshape(B, S, nhead, dk).transpose(0, 2, 1, 3)
    v = proj(value).reshape(B, S, nhead, dk).transpose(0, 2, 1, 3)
    scores = jnp.einsum('bhqd,bhkd->bhqk', q, k) / jnp.sqrt(jnp.float32(dk))
    attn = jax.nn.softmax(scores, axis=-1)
    ctx = jnp.einsum('bhqk,bhkd->bhqd', attn, v)
    ctx = ctx.transpose(0, 2, 1, 3).reshape(B, S, D)
    return ctx @ wo.T + bo


if __name__ == "__main__":
    B, S, D, H = 2, 8, 512, 1   # batch=2, seq=8, d_model=512, nhead=1

    root = jax.random.PRNGKey(0)
    k1, k2, k3, k4, k5, k6, k7 = jax.random.split(root, 7)

    # Deterministic nn.Linear-style init: U(-1/sqrt(fan_in), 1/sqrt(fan_in)).
    lim = 1.0 / math.sqrt(D)
    wq = jax.random.uniform(k1, (D, D), jnp.float32, -lim, lim)
    bq = jax.random.uniform(k2, (1, D), jnp.float32, -lim, lim)
    wo = jax.random.uniform(k3, (D, D), jnp.float32, -lim, lim)
    bo = jax.random.uniform(k4, (1, D), jnp.float32, -lim, lim)

    query = jax.random.normal(k5, (B, S, D), jnp.float32)
    key_in = jax.random.normal(k6, (B, S, D), jnp.float32)
    value_in = jax.random.normal(k7, (B, S, D), jnp.float32)

    out = multi_head_attention(query, key_in, value_in, wq, bq, wo, bo, nhead=H)
    out = jax.block_until_ready(out)

    ref = _reference(query, key_in, value_in, wq, bq, wo, bo, H)
    assert out.shape == (B, S, D)
    err = jnp.max(jnp.abs(out - ref))
    # bf16 MXU operands + approx reciprocal vs an exact-f32 reference:
    # loosened tolerance (f32 accumulation keeps the error ~1e-2-scale).
    assert jnp.allclose(out, ref, atol=5e-2, rtol=5e-2), f"max abs err = {err}"

    print("KERNEL_OK")
</pallas_src>

<mosaic_0001>
module attributes {stable_mosaic.version = 11 : i64} {
  func.func @_mha_kernel(%arg0: i32, %arg1: memref<1x8x512xf32, #tpu.memory_space<vmem>>, %arg2: memref<1x8x512xf32, #tpu.memory_space<vmem>>, %arg3: memref<1x8x512xf32, #tpu.memory_space<vmem>>, %arg4: memref<512x512xbf16, #tpu.memory_space<vmem>>, %arg5: memref<1x512xf32, #tpu.memory_space<vmem>>, %arg6: memref<512x512xbf16, #tpu.memory_space<vmem>>, %arg7: memref<1x512xf32, #tpu.memory_space<vmem>>, %arg8: memref<1x8x512xf32, #tpu.memory_space<vmem>>, %arg9: memref<24x512xbf16, #tpu.memory_space<vmem>>, %arg10: memref<24x512xbf16, #tpu.memory_space<vmem>>, %arg11: memref<8x512xbf16, #tpu.memory_space<vmem>>) attributes {dimension_semantics = [#tpu.dimension_semantics<parallel>], iteration_bounds = array<i64: 2>, scalar_prefetch = 0 : i64, scratch_operands = 3 : i64, tpu.core_type = #tpu.core_type<tc>, window_params = [{transform_indices = @transform_0, window_bounds = array<i64: 1, 8, 512>}, {transform_indices = @transform_1, window_bounds = array<i64: 1, 8, 512>}, {transform_indices = @transform_2, window_bounds = array<i64: 1, 8, 512>}, {pipeline_mode = #tpu.pipeline_mode<synchronous>, transform_indices = @transform_3, window_bounds = array<i64: 512, 512>}, {pipeline_mode = #tpu.pipeline_mode<synchronous>, transform_indices = @transform_4, window_bounds = array<i64: 1, 512>}, {pipeline_mode = #tpu.pipeline_mode<synchronous>, transform_indices = @transform_5, window_bounds = array<i64: 512, 512>}, {pipeline_mode = #tpu.pipeline_mode<synchronous>, transform_indices = @transform_6, window_bounds = array<i64: 1, 512>}, {transform_indices = @transform_7, window_bounds = array<i64: 1, 8, 512>}]} {
    %c0 = arith.constant 0 : index
    %c0_0 = arith.constant 0 : index
    %c0_1 = arith.constant 0 : index
    %0 = vector.load %arg1[%c0, %c0_0, %c0_1] : memref<1x8x512xf32, #tpu.memory_space<vmem>>, vector<1x8x512xf32>
    %1 = vector.shape_cast %0 : vector<1x8x512xf32> to vector<8x512xf32>
    %2 = arith.truncf %1 : vector<8x512xf32> to vector<8x512xbf16>
    %c0_2 = arith.constant 0 : index
    %c0_3 = arith.constant 0 : index
    %3 = vector.load %arg9[%c0_2, %c0_3] : memref<24x512xbf16, #tpu.memory_space<vmem>>, vector<8x512xbf16>
    tpu.vector_store %arg9[%c0_2, %c0_3], %2 {strides = array<i32>} : memref<24x512xbf16, #tpu.memory_space<vmem>>, vector<8x512xbf16>,
    %c0_4 = arith.constant 0 : index
    %c0_5 = arith.constant 0 : index
    %c0_6 = arith.constant 0 : index
    %4 = vector.load %arg2[%c0_4, %c0_5, %c0_6] : memref<1x8x512xf32, #tpu.memory_space<vmem>>, vector<1x8x512xf32>
    %5 = vector.shape_cast %4 : vector<1x8x512xf32> to vector<8x512xf32>
    %6 = arith.truncf %5 : vector<8x512xf32> to vector<8x512xbf16>
    %c8 = arith.constant 8 : index
    %c0_7 = arith.constant 0 : index
    %7 = vector.load %arg9[%c8, %c0_7] : memref<24x512xbf16, #tpu.memory_space<vmem>>, vector<8x512xbf16>
    tpu.vector_store %arg9[%c8, %c0_7], %6 {strides = array<i32>} : memref<24x512xbf16, #tpu.memory_space<vmem>>, vector<8x512xbf16>,
    %c0_8 = arith.constant 0 : index
    %c0_9 = arith.constant 0 : index
    %c0_10 = arith.constant 0 : index
    %8 = vector.load %arg3[%c0_8, %c0_9, %c0_10] : memref<1x8x512xf32, #tpu.memory_space<vmem>>, vector<1x8x512xf32>
    %9 = vector.shape_cast %8 : vector<1x8x512xf32> to vector<8x512xf32>
    %10 = arith.truncf %9 : vector<8x512xf32> to vector<8x512xbf16>
    %c16 = arith.constant 16 : index
    %c0_11 = arith.constant 0 : index
    %11 = vector.load %arg9[%c16, %c0_11] : memref<24x512xbf16, #tpu.memory_space<vmem>>, vector<8x512xbf16>
    tpu.vector_store %arg9[%c16, %c0_11], %10 {strides = array<i32>} : memref<24x512xbf16, #tpu.memory_space<vmem>>, vector<8x512xbf16>,
    %c0_12 = arith.constant 0 : index
    %c0_13 = arith.constant 0 : index
    %12 = vector.load %arg9[%c0_12, %c0_13] : memref<24x512xbf16, #tpu.memory_space<vmem>>, vector<24x512xbf16>
    %c0_14 = arith.constant 0 : index
    %c0_15 = arith.constant 0 : index
    %13 = vector.load %arg4[%c0_14, %c0_15] : memref<512x512xbf16, #tpu.memory_space<vmem>>, vector<512x512xbf16>
    %cst = arith.constant dense<0.000000e+00> : vector<24x512xf32>
    %14 = tpu.matmul %12, %13, %cst {dimension_numbers = #tpu.dot_dimension_numbers<[1], [0], [0], [1], [0, 0, 1, 1], [], []>} : vector<24x512xbf16>, vector<512x512xbf16>, vector<24x512xf32> -> vector<24x512xf32>
    %c0_16 = arith.constant 0 : index
    %c0_17 = arith.constant 0 : index
    %15 = vector.load %arg5[%c0_16, %c0_17] : memref<1x512xf32, #tpu.memory_space<vmem>>, vector<1x512xf32>
    %16 = vector.broadcast %15 : vector<1x512xf32> to vector<24x512xf32>
    %17 = arith.addf %14, %16 : vector<24x512xf32>
    %18 = tpu.iota {dimensions = array<i32: 0>} : vector<24x1xi32>
    %c8_i32 = arith.constant 8 : i32
    %19 = vector.broadcast %c8_i32 : i32 to vector<24x1xi32>
    %20 = arith.cmpi slt, %18, %19 : vector<24x1xi32>
    %cst_18 = arith.constant 0.0441941731 : f32
    %cst_19 = arith.constant 1.000000e+00 : f32
    %21 = vector.broadcast %cst_18 : f32 to vector<24x1xf32>
    %22 = vector.broadcast %cst_19 : f32 to vector<24x1xf32>
    %23 = arith.select %20, %21, %22 : vector<24x1xi1>, vector<24x1xf32>
    %24 = vector.broadcast %23 : vector<24x1xf32> to vector<24x512xf32>
    %25 = arith.mulf %17, %24 : vector<24x512xf32>
    %26 = arith.truncf %25 : vector<24x512xf32> to vector<24x512xbf16>
    %c0_20 = arith.constant 0 : index
    %c0_21 = arith.constant 0 : index
    %27 = vector.load %arg10[%c0_20, %c0_21] : memref<24x512xbf16, #tpu.memory_space<vmem>>, vector<24x512xbf16>
    tpu.vector_store %arg10[%c0_20, %c0_21], %26 {strides = array<i32>} : memref<24x512xbf16, #tpu.memory_space<vmem>>, vector<24x512xbf16>,
    %c0_22 = arith.constant 0 : index
    %c0_23 = arith.constant 0 : index
    %28 = vector.load %arg10[%c0_22, %c0_23] : memref<24x512xbf16, #tpu.memory_space<vmem>>, vector<8x512xbf16>
    %c8_24 = arith.constant 8 : index
    %c0_25 = arith.constant 0 : index
    %29 = vector.load %arg10[%c8_24, %c0_25] : memref<24x512xbf16, #tpu.memory_space<vmem>>, vector<8x512xbf16>
    %c16_26 = arith.constant 16 : index
    %c0_27 = arith.constant 0 : index
    %30 = vector.load %arg10[%c16_26, %c0_27] : memref<24x512xbf16, #tpu.memory_space<vmem>>, vector<8x512xbf16>
    %cst_28 = arith.constant dense<0.000000e+00> : vector<8x8xf32>
    %31 = tpu.matmul %28, %29, %cst_28 {dimension_numbers = #tpu.dot_dimension_numbers<[1], [1], [0], [0], [0, 0, 1, 0], [], []>} : vector<8x512xbf16>, vector<8x512xbf16>, vector<8x8xf32> -> vector<8x8xf32>
    %cst_29 = arith.constant dense<0xFF800000> : vector<8xf32>
    %32 = vector.multi_reduction <maximumf>, %31, %cst_29 [1] : vector<8x8xf32> to vector<8xf32>
    %33 = vector.shape_cast %32 : vector<8xf32> to vector<8x1xf32>
    %34 = vector.broadcast %33 : vector<8x1xf32> to vector<8x8xf32>
    %35 = arith.subf %31, %34 : vector<8x8xf32>
    %36 = math.exp %35 : vector<8x8xf32>
    %cst_30 = arith.constant dense<0.000000e+00> : vector<8xf32>
    %37 = vector.multi_reduction <add>, %36, %cst_30 [1] : vector<8x8xf32> to vector<8xf32>
    %38 = vector.shape_cast %37 : vector<8xf32> to vector<8x1xf32>
    %39 = tpu.reciprocal %38 {approx = true} : vector<8x1xf32> -> vector<8x1xf32>
    %40 = vector.broadcast %39 : vector<8x1xf32> to vector<8x8xf32>
    %41 = arith.mulf %36, %40 : vector<8x8xf32>
    %42 = arith.truncf %41 : vector<8x8xf32> to vector<8x8xbf16>
    %cst_31 = arith.constant dense<0.000000e+00> : vector<8x512xf32>
    %43 = tpu.matmul %42, %30, %cst_31 {dimension_numbers = #tpu.dot_dimension_numbers<[1], [0], [0], [1], [0, 0, 1, 1], [], []>} : vector<8x8xbf16>, vector<8x512xbf16>, vector<8x512xf32> -> vector<8x512xf32>
    %44 = arith.truncf %43 : vector<8x512xf32> to vector<8x512xbf16>
    %c0_32 = arith.constant 0 : index
    %c0_33 = arith.constant 0 : index
    %45 = vector.load %arg11[%c0_32, %c0_33] : memref<8x512xbf16, #tpu.memory_space<vmem>>, vector<8x512xbf16>
    tpu.vector_store %arg11[%c0_32, %c0_33], %44 {strides = array<i32>} : memref<8x512xbf16, #tpu.memory_space<vmem>>, vector<8x512xbf16>,
    %c0_34 = arith.constant 0 : index
    %c0_35 = arith.constant 0 : index
    %46 = vector.load %arg11[%c0_34, %c0_35] : memref<8x512xbf16, #tpu.memory_space<vmem>>, vector<8x512xbf16>
    %c0_36 = arith.constant 0 : index
    %c0_37 = arith.constant 0 : index
    %47 = vector.load %arg6[%c0_36, %c0_37] : memref<512x512xbf16, #tpu.memory_space<vmem>>, vector<512x512xbf16>
    %cst_38 = arith.constant dense<0.000000e+00> : vector<8x512xf32>
    %48 = tpu.matmul %46, %47, %cst_38 {dimension_numbers = #tpu.dot_dimension_numbers<[1], [0], [0], [1], [0, 0, 1, 1], [], []>} : vector<8x512xbf16>, vector<512x512xbf16>, vector<8x512xf32> -> vector<8x512xf32>
    %c0_39 = arith.constant 0 : index
    %c0_40 = arith.constant 0 : index
    %49 = vector.load %arg7[%c0_39, %c0_40] : memref<1x512xf32, #tpu.memory_space<vmem>>, vector<1x512xf32>
    %50 = vector.broadcast %49 : vector<1x512xf32> to vector<8x512xf32>
    %51 = arith.addf %48, %50 : vector<8x512xf32>
    %52 = vector.shape_cast %51 : vector<8x512xf32> to vector<1x8x512xf32>
    %c0_41 = arith.constant 0 : index
    %c0_42 = arith.constant 0 : index
    %c0_43 = arith.constant 0 : index
    %53 = vector.load %arg8[%c0_41, %c0_42, %c0_43] : memref<1x8x512xf32, #tpu.memory_space<vmem>>, vector<1x8x512xf32>
    tpu.vector_store %arg8[%c0_41, %c0_42, %c0_43], %52 {strides = array<i32>} : memref<1x8x512xf32, #tpu.memory_space<vmem>>, vector<1x8x512xf32>,
    return
  }
  func.func @transform_0(%arg0: i32) -> (i32, i32, i32) {
    %c0_i32 = arith.constant 0 : i32
    %c0_i32_0 = arith.constant 0 : i32
    %c0_i32_1 = arith.constant 0 : i32
    return %arg0, %c0_i32, %c0_i32_0 : i32, i32, i32
  }
  func.func @transform_1(%arg0: i32) -> (i32, i32, i32) {
    %c0_i32 = arith.constant 0 : i32
    %c0_i32_0 = arith.constant 0 : i32
    %c0_i32_1 = arith.constant 0 : i32
    return %arg0, %c0_i32, %c0_i32_0 : i32, i32, i32
  }
  func.func @transform_2(%arg0: i32) -> (i32, i32, i32) {
    %c0_i32 = arith.constant 0 : i32
    %c0_i32_0 = arith.constant 0 : i32
    %c0_i32_1 = arith.constant 0 : i32
    return %arg0, %c0_i32, %c0_i32_0 : i32, i32, i32
  }
  func.func @transform_3(%arg0: i32) -> (i32, i32) {
    %c0_i32 = arith.constant 0 : i32
    %c0_i32_0 = arith.constant 0 : i32
    %c0_i32_1 = arith.constant 0 : i32
    return %c0_i32, %c0_i32_0 : i32, i32
  }
  func.func @transform_4(%arg0: i32) -> (i32, i32) {
    %c0_i32 = arith.constant 0 : i32
    %c0_i32_0 = arith.constant 0 : i32
    %c0_i32_1 = arith.constant 0 : i32
    return %c0_i32, %c0_i32_0 : i32, i32
  }
  func.func @transform_5(%arg0: i32) -> (i32, i32) {
    %c0_i32 = arith.constant 0 : i32
    %c0_i32_0 = arith.constant 0 : i32
    %c0_i32_1 = arith.constant 0 : i32
    return %c0_i32, %c0_i32_0 : i32, i32
  }
  func.func @transform_6(%arg0: i32) -> (i32, i32) {
    %c0_i32 = arith.constant 0 : i32
    %c0_i32_0 = arith.constant 0 : i32
    %c0_i32_1 = arith.constant 0 : i32
    return %c0_i32, %c0_i32_0 : i32, i32
  }
  func.func @transform_7(%arg0: i32) -> (i32, i32, i32) {
    %c0_i32 = arith.constant 0 : i32
    %c0_i32_0 = arith.constant 0 : i32
    %c0_i32_1 = arith.constant 0 : i32
    return %arg0, %c0_i32, %c0_i32_0 : i32, i32, i32
  }
}

</mosaic_0001>

<llo_original>
// kernel: tpu_custom_call.1
$region0: #{tpu_custom_call.1}
  #allocation0 [shape = 'u32[]', space=smem, size = 0x4, offset = 0x4, fixed_abs, tag = 'smem constant byte address 0x4 - core index']
  #allocation1 [shape = 'u32[144,128]{1,0:T(1,128)}', space=vmem, size = 0x12000, scoped, tag = 'internal scratch']
  #allocation2 [shape = 'bf16[24,512]{1,0:T(8,128)(2,1)}', space=vmem, size = 0x6000, scoped, tag = 'scratch operand']
  #allocation3 [shape = 'bf16[24,512]{1,0:T(8,128)(2,1)}', space=vmem, size = 0x6000, scoped, tag = 'scratch operand']
  #allocation4 [shape = 'bf16[8,512]{1,0:T(8,128)(2,1)}', space=vmem, size = 0x2000, scoped, tag = 'scratch operand']
  %s0 = inlined_call_operand.hbm [shape: f32[2,8,512], index: 0, kind: input, shape index: {}]
  %s1 = inlined_call_operand.hbm [shape: f32[2,8,512], index: 1, kind: input, shape index: {}]
  %s2 = inlined_call_operand.hbm [shape: f32[2,8,512], index: 2, kind: input, shape index: {}]
  %s3 = inlined_call_operand.hbm [shape: bf16[512,512], index: 3, kind: input, shape index: {}]
  %s4 = inlined_call_operand.hbm [shape: f32[1,512], index: 4, kind: input, shape index: {}]
  %s5 = inlined_call_operand.hbm [shape: bf16[512,512], index: 5, kind: input, shape index: {}]
  %s6 = inlined_call_operand.hbm [shape: f32[1,512], index: 6, kind: input, shape index: {}]
  %s7 = inlined_call_operand.hbm [shape: f32[2,8,512], index: 7, kind: output, shape index: {}]
  %s8 = sld [smem:[#allocation0]]
  $region89: #{tpu_custom_call.1} parent=0
    _
  %s10 = ssub.s32 1, %s8
  %s11 = scalar_select 0, %s10, %s8
  $region1: #{tpu_custom_call.1} parent=0
    #allocation5 [shape = 'u8[32768]{0}', space=vmem, size = 0x8000, scoped, tag = 'input window, operand 0']
    #allocation6 [shape = 's32[2]{0}', space=sflag, size = 0x8, scoped, tag = 'scoped memory for tpu_custom_call.1']
    #allocation7 [shape = 's32[2]{0}', space=sflag, size = 0x8, scoped, tag = 'scoped memory for tpu_custom_call.1']
    #allocation8 [shape = 'u8[32768]{0}', space=vmem, size = 0x8000, scoped, tag = 'input window, operand 1']
    #allocation9 [shape = 's32[2]{0}', space=sflag, size = 0x8, scoped, tag = 'scoped memory for tpu_custom_call.1']
    #allocation10 [shape = 'u8[32768]{0}', space=vmem, size = 0x8000, scoped, tag = 'input window, operand 2']
    #allocation11 [shape = 'u8[524288]{0}', space=vmem, size = 0x80000, scoped, tag = 'input window, operand 3, single buffered']
    #allocation12 [shape = 's32[1]{0}', space=sflag, size = 0x4, scoped, tag = 'scoped memory for tpu_custom_call.1']
    #allocation13 [shape = 'u8[2048]{0}', space=vmem, size = 0x800, scoped, tag = 'input window, operand 4, single buffered']
    #allocation14 [shape = 'u8[524288]{0}', space=vmem, size = 0x80000, scoped, tag = 'input window, operand 5, single buffered']
    #allocation15 [shape = 's32[1]{0}', space=sflag, size = 0x4, scoped, tag = 'scoped memory for tpu_custom_call.1']
    #allocation16 [shape = 'u8[2048]{0}', space=vmem, size = 0x800, scoped, tag = 'input window, operand 6, single buffered']
    #allocation17 [shape = 'u8[32768]{0}', space=vmem, size = 0x8000, scoped, tag = 'output window, operand 0']
    %12 = vsyncpa [#allocation6], 0
    %s13 = scalar_lea.sflag [#allocation6], 1
    %14 = vsyncpa %s13, 0
    %15 = vsyncpa [#allocation9], 0
    %s16 = scalar_lea.sflag [#allocation9], 1
    %17 = vsyncpa %s16, 0
    %18 = vsyncpa [#allocation12], 0
    %19 = vsyncpa [#allocation15], 0
    %20 = vsyncpa [#allocation7], 0
    %s21 = scalar_lea.sflag [#allocation7], 1
    %22 = vsyncpa %s21, 0
    loop: start=0, step=1, limit=4
    $region2: #{tpu_custom_call.1} parent=1 // loop_pre_header
      _
    $region3: #{tpu_custom_call.1} parent=1 // loop_header
      %s24 = sphi 0, %s28
      %p25 = scmp.ge.s32.totalorder %s24, 4
      %s34 = sphi 0, %s36
      %s37 = sphi 0, %s34
      %s38 = sphi 0, %s37
      %s54 = sphi 0, %s38
      %s60 = sphi 0, %s62
      %s63 = sphi 0, %s60
      %s64 = sphi 0, %s63
      %s80 = sphi 0, %s64
      %s86 = sphi 0, %s88
      %s89 = sphi 0, %s86
      %s90 = sphi 0, %s89
      %s106 = sphi 0, %s90
      %s110 = sphi 0, %s110
      %s112 = sphi 0, %s110
      %s113 = sphi 0, %s112
      %s127 = sphi 0, %s113
      %s131 = sphi 0, %s131
      %s133 = sphi 0, %s131
      %s134 = sphi 0, %s133
      %s148 = sphi 0, %s134
      %s152 = sphi 0, %s152
      %s154 = sphi 0, %s152
      %s155 = sphi 0, %s154
      %s169 = sphi 0, %s155
      %s173 = sphi 0, %s173
      %s175 = sphi 0, %s173
      %s176 = sphi 0, %s175
      %s190 = sphi 0, %s176
      %s196 = sphi 0, %s198
      %s199 = sphi 0, %s196
      %s200 = sphi 0, %s199
      %s216 = sphi 0, %s200
    $region4: #{tpu_custom_call.1} parent=1 // loop_header_branch
      %27 = sbr.rel (%p25) target = $region8
    $region5: #{tpu_custom_call.1} parent=1 // loop_body
      %s29 = ssub.s32 %s24, 1
      %s30 = ssub.s32 %s24, 2
      %s31 = sadd.s32 %s24, 1
      %s32 = ssub.s32 %s24, %s31
      %p33 = scmp.eq.s32.totalorder %s32, 0
      %s35 = sadd.s32 %s34, 1
      %s36 = scalar_select %p33, %s34, %s35
      %p39 = pneg %p33
      %p40 = scmp.eq.s32.totalorder %s24, 1
      %p41 = por %p39, %p40
      %p42 = scmp.ne.s32.totalorder %s34, %s37
      %p43 = scmp.eq.s32.totalorder %s24, 0
      %p44 = por %p42, %p43
      %p45 = scmp.ne.s32.totalorder %s34, %s37
      %p46 = scmp.eq.s32.totalorder %s29, 1
      %p47 = por %p45, %p46
      %p48 = scmp.ne.s32.totalorder %s37, %s38
      %p49 = scmp.eq.s32.totalorder %s29, 0
      %p50 = por %p48, %p49
      %p51 = scmp.ne.s32.totalorder %s37, %s38
      %p52 = scmp.eq.s32.totalorder %s30, 1
      %p53 = por %p51, %p52
      %p55 = scmp.ne.s32.totalorder %s38, %s54
      %p56 = scmp.eq.s32.totalorder %s30, 0
      %p57 = por %p55, %p56
      %s58 = ssub.s32 %s24, %s31
      %p59 = scmp.eq.s32.totalorder %s58, 0
      %s61 = sadd.s32 %s60, 1
      %s62 = scalar_select %p59, %s60, %s61
      %p65 = pneg %p59
      %p66 = scmp.eq.s32.totalorder %s24, 1
      %p67 = por %p65, %p66
      %p68 = scmp.ne.s32.totalorder %s60, %s63
      %p69 = scmp.eq.s32.totalorder %s24, 0
      %p70 = por %p68, %p69
      %p71 = scmp.ne.s32.totalorder %s60, %s63
      %p72 = scmp.eq.s32.totalorder %s29, 1
      %p73 = por %p71, %p72
      %p74 = scmp.ne.s32.totalorder %s63, %s64
      %p75 = scmp.eq.s32.totalorder %s29, 0
      %p76 = por %p74, %p75
      %p77 = scmp.ne.s32.totalorder %s63, %s64
      %p78 = scmp.eq.s32.totalorder %s30, 1
      %p79 = por %p77, %p78
      %p81 = scmp.ne.s32.totalorder %s64, %s80
      %p82 = scmp.eq.s32.totalorder %s30, 0
      %p83 = por %p81, %p82
      %s84 = ssub.s32 %s24, %s31
      %p85 = scmp.eq.s32.totalorder %s84, 0
      %s87 = sadd.s32 %s86, 1
      %s88 = scalar_select %p85, %s86, %s87
      %p91 = pneg %p85
      %p92 = scmp.eq.s32.totalorder %s24, 1
      %p93 = por %p91, %p92
      %p94 = scmp.ne.s32.totalorder %s86, %s89
      %p95 = scmp.eq.s32.totalorder %s24, 0
      %p96 = por %p94, %p95
      %p97 = scmp.ne.s32.totalorder %s86, %s89
      %p98 = scmp.eq.s32.totalorder %s29, 1
      %p99 = por %p97, %p98
      %p100 = scmp.ne.s32.totalorder %s89, %s90
      %p101 = scmp.eq.s32.totalorder %s29, 0
      %p102 = por %p100, %p101
      %p103 = scmp.ne.s32.totalorder %s89, %s90
      %p104 = scmp.eq.s32.totalorder %s30, 1
      %p105 = por %p103, %p104
      %p107 = scmp.ne.s32.totalorder %s90, %s106
      %p108 = scmp.eq.s32.totalorder %s30, 0
      %p109 = por %p107, %p108
      %s111 = sadd.s32 %s110, 1
      %p114 = scmp.eq.s32.totalorder %s24, 1
      %p115 = scmp.ne.s32.totalorder %s110, %s112
      %p116 = scmp.eq.s32.totalorder %s24, 0
      %p117 = por %p115, %p116
      %p118 = scmp.ne.s32.totalorder %s110, %s112
      %p119 = scmp.eq.s32.totalorder %s29, 1
      %p120 = por %p118, %p119
      %p121 = scmp.ne.s32.totalorder %s112, %s113
      %p122 = scmp.eq.s32.totalorder %s29, 0
      %p123 = por %p121, %p122
      %p124 = scmp.ne.s32.totalorder %s112, %s113
      %p125 = scmp.eq.s32.totalorder %s30, 1
      %p126 = por %p124, %p125
      %p128 = scmp.ne.s32.totalorder %s113, %s127
      %p129 = scmp.eq.s32.totalorder %s30, 0
      %p130 = por %p128, %p129
      %s132 = sadd.s32 %s131, 1
      %p135 = scmp.eq.s32.totalorder %s24, 1
      %p136 = scmp.ne.s32.totalorder %s131, %s133
      %p137 = scmp.eq.s32.totalorder %s24, 0
      %p138 = por %p136, %p137
      %p139 = scmp.ne.s32.totalorder %s131, %s133
      %p140 = scmp.eq.s32.totalorder %s29, 1
      %p141 = por %p139, %p140
      %p142 = scmp.ne.s32.totalorder %s133, %s134
      %p143 = scmp.eq.s32.totalorder %s29, 0
      %p144 = por %p142, %p143
      %p145 = scmp.ne.s32.totalorder %s133, %s134
      %p146 = scmp.eq.s32.totalorder %s30, 1
      %p147 = por %p145, %p146
      %p149 = scmp.ne.s32.totalorder %s134, %s148
      %p150 = scmp.eq.s32.totalorder %s30, 0
      %p151 = por %p149, %p150
      %s153 = sadd.s32 %s152, 1
      %p156 = scmp.eq.s32.totalorder %s24, 1
      %p157 = scmp.ne.s32.totalorder %s152, %s154
      %p158 = scmp.eq.s32.totalorder %s24, 0
      %p159 = por %p157, %p158
      %p160 = scmp.ne.s32.totalorder %s152, %s154
      %p161 = scmp.eq.s32.totalorder %s29, 1
      %p162 = por %p160, %p161
      %p163 = scmp.ne.s32.totalorder %s154, %s155
      %p164 = scmp.eq.s32.totalorder %s29, 0
      %p165 = por %p163, %p164
      %p166 = scmp.ne.s32.totalorder %s154, %s155
      %p167 = scmp.eq.s32.totalorder %s30, 1
      %p168 = por %p166, %p167
      %p170 = scmp.ne.s32.totalorder %s155, %s169
      %p171 = scmp.eq.s32.totalorder %s30, 0
      %p172 = por %p170, %p171
      %s174 = sadd.s32 %s173, 1
      %p177 = scmp.eq.s32.totalorder %s24, 1
      %p178 = scmp.ne.s32.totalorder %s173, %s175
      %p179 = scmp.eq.s32.totalorder %s24, 0
      %p180 = por %p178, %p179
      %p181 = scmp.ne.s32.totalorder %s173, %s175
      %p182 = scmp.eq.s32.totalorder %s29, 1
      %p183 = por %p181, %p182
      %p184 = scmp.ne.s32.totalorder %s175, %s176
      %p185 = scmp.eq.s32.totalorder %s29, 0
      %p186 = por %p184, %p185
      %p187 = scmp.ne.s32.totalorder %s175, %s176
      %p188 = scmp.eq.s32.totalorder %s30, 1
      %p189 = por %p187, %p188
      %p191 = scmp.ne.s32.totalorder %s176, %s190
      %p192 = scmp.eq.s32.totalorder %s30, 0
      %p193 = por %p191, %p192
      %s194 = ssub.s32 %s24, %s31
      %p195 = scmp.eq.s32.totalorder %s194, 0
      %s197 = sadd.s32 %s196, 1
      %s198 = scalar_select %p195, %s196, %s197
      %p201 = pneg %p195
      %p202 = scmp.eq.s32.totalorder %s24, 1
      %p203 = por %p201, %p202
      %p204 = scmp.ne.s32.totalorder %s196, %s199
      %p205 = scmp.eq.s32.totalorder %s24, 0
      %p206 = por %p204, %p205
      %p207 = scmp.ne.s32.totalorder %s196, %s199
      %p208 = scmp.eq.s32.totalorder %s29, 1
      %p209 = por %p207, %p208
      %p210 = scmp.ne.s32.totalorder %s199, %s200
      %p211 = scmp.eq.s32.totalorder %s29, 0
      %p212 = por %p210, %p211
      %p213 = scmp.ne.s32.totalorder %s199, %s200
      %p214 = scmp.eq.s32.totalorder %s30, 1
      %p215 = por %p213, %p214
      %p217 = scmp.ne.s32.totalorder %s200, %s216
      %p218 = scmp.eq.s32.totalorder %s30, 0
      %p219 = por %p217, %p218
      %p220 = scmp.le.s32.totalorder 1, %s24
      %p221 = scmp.lt.s32.totalorder %s24, 3
      %p222 = pnand %p220, %p221
      %p223 = pneg %p222
      // Predicated region
      $region9: #{tpu_custom_call.1} parent=5 // pred_check
        _
      $region10: #{tpu_custom_call.1} parent=5 // pred_check_branch
        %225 = sbr.rel (%p222) target = $region12
      $region11: #{tpu_custom_call.1} parent=5 // pred_region
        %s226 = ssub.s32 %s24, 1
        // Predicated region
        $region13: #{tpu_custom_call.1} parent=11 // pred_check
          %p227 = pneg %p123
        $region14: #{tpu_custom_call.1} parent=11 // pred_check_branch
          %229 = sbr.rel (%p227) target = $region16
        $region15: #{tpu_custom_call.1} parent=11 // pred_region
          %s231 = ssub.s32 16384, 16384
          %232 = vsyncadd [#allocation12], %s231
          %s233 = sshll.u32 [#allocation11], 4
          %s234 = int_to_ptr.vmem [resolvable:$true] %s233
          %239 = dma.hbm_to_vmem [thread:$0]  %s3, 16384, %s234, [#allocation12], 256, 256, 16
        $region16: #{tpu_custom_call.1} parent=11 // pred_fallthru
          _
        // Predicated region
        $region17: #{tpu_custom_call.1} parent=11 // pred_check
          %p240 = pneg %p144
        $region18: #{tpu_custom_call.1} parent=11 // pred_check_branch
          %242 = sbr.rel (%p240) target = $region20
        $region19: #{tpu_custom_call.1} parent=11 // pred_region
          %s244 = ssub.s32 64, 64
          %245 = vsyncadd [#allocation12], %s244
          %s247 = sshll.u32 [#allocation13], 4
          %s248 = int_to_ptr.vmem [resolvable:$true] %s247
          %250 = dma.hbm_to_vmem [thread:$0]  %s4, 64, %s248, [#allocation12]
        $region20: #{tpu_custom_call.1} parent=11 // pred_fallthru
          _
        // Predicated region
        $region21: #{tpu_custom_call.1} parent=11 // pred_check
          %p251 = pneg %p165
        $region22: #{tpu_custom_call.1} parent=11 // pred_check_branch
          %253 = sbr.rel (%p251) target = $region24
        $region23: #{tpu_custom_call.1} parent=11 // pred_region
          %s255 = ssub.s32 16384, 16384
          %256 = vsyncadd [#allocation15], %s255
          %s257 = sshll.u32 [#allocation14], 4
          %s258 = int_to_ptr.vmem [resolvable:$true] %s257
          %263 = dma.hbm_to_vmem [thread:$0]  %s5, 16384, %s258, [#allocation15], 256, 256, 16
        $region24: #{tpu_custom_call.1} parent=11 // pred_fallthru
          _
        // Predicated region
        $region25: #{tpu_custom_call.1} parent=11 // pred_check
          %p264 = pneg %p186
        $region26: #{tpu_custom_call.1} parent=11 // pred_check_branch
          %266 = sbr.rel (%p264) target = $region28
        $region27: #{tpu_custom_call.1} parent=11 // pred_region
          %s268 = ssub.s32 64, 64
          %269 = vsyncadd [#allocation15], %s268
          %s271 = sshll.u32 [#allocation16], 4
          %s272 = int_to_ptr.vmem [resolvable:$true] %s271
          %274 = dma.hbm_to_vmem [thread:$0]  %s6, 64, %s272, [#allocation15]
        $region28: #{tpu_custom_call.1} parent=11 // pred_fallthru
          _
      $region12: #{tpu_custom_call.1} parent=5 // pred_fallthru
        _
      %p275 = scmp.lt.s32.totalorder %s24, 2
      // Predicated region
      $region29: #{tpu_custom_call.1} parent=5 // pred_check
        %p276 = pneg %p275
      $region30: #{tpu_custom_call.1} parent=5 // pred_check_branch
        %278 = sbr.rel (%p276) target = $region32
      $region31: #{tpu_custom_call.1} parent=5 // pred_region
        // Predicated region
        $region33: #{tpu_custom_call.1} parent=31 // pred_check
          %p279 = pneg %p44
        $region34: #{tpu_custom_call.1} parent=31 // pred_check_branch
          %281 = sbr.rel (%p279) target = $region36
        $region35: #{tpu_custom_call.1} parent=31 // pred_region
          %s282 = sand.u32 %s34, 1
          %s283 = scalar_lea.sflag [#allocation6], %s282
          %s284 = sand.u32 %s34, 1
          %s285 = smul.addr %s284, 32
          %s286 = scalar_lea.vmem [#allocation5], %s285
          %s288 = ssub.s32 512, 512
          %289 = vsyncadd %s283, %s288
          %s290 = smul.addr %s24, 4
          %s291 = smul.addr %s290, 128
          %s292 = scalar_lea.hbm %s0, %s291
          %s294 = sshll.u32 %s286, 4
          %s295 = int_to_ptr.vmem [resolvable:$true] %s294
          %297 = dma.hbm_to_vmem [thread:$0]  %s292, 512, %s295, %s283
        $region36: #{tpu_custom_call.1} parent=31 // pred_fallthru
          _
        // Predicated region
        $region37: #{tpu_custom_call.1} parent=31 // pred_check
          %p298 = pneg %p70
        $region38: #{tpu_custom_call.1} parent=31 // pred_check_branch
          %300 = sbr.rel (%p298) target = $region40
        $region39: #{tpu_custom_call.1} parent=31 // pred_region
          %s301 = sand.u32 %s24, 1
          %s302 = scalar_lea.sflag [#allocation9], %s301
          %s303 = sand.u32 %s60, 1
          %s304 = smul.addr %s303, 32
          %s305 = scalar_lea.vmem [#allocation8], %s304
          %s307 = ssub.s32 512, 512
          %308 = vsyncadd %s302, %s307
          %s309 = smul.addr %s24, 4
          %s310 = smul.addr %s309, 128
          %s311 = scalar_lea.hbm %s1, %s310
          %s313 = sshll.u32 %s305, 4
          %s314 = int_to_ptr.vmem [resolvable:$true] %s313
          %316 = dma.hbm_to_vmem [thread:$0]  %s311, 512, %s314, %s302
        $region40: #{tpu_custom_call.1} parent=31 // pred_fallthru
          _
        // Predicated region
        $region41: #{tpu_custom_call.1} parent=31 // pred_check
          %p317 = pneg %p96
        $region42: #{tpu_custom_call.1} parent=31 // pred_check_branch
          %319 = sbr.rel (%p317) target = $region44
        $region43: #{tpu_custom_call.1} parent=31 // pred_region
          %s320 = sand.u32 %s24, 1
          %s321 = scalar_lea.sflag [#allocation9], %s320
          %s322 = sand.u32 %s86, 1
          %s323 = smul.addr %s322, 32
          %s324 = scalar_lea.vmem [#allocation10], %s323
          %s326 = ssub.s32 512, 512
          %327 = vsyncadd %s321, %s326
          %s328 = smul.addr %s24, 4
          %s329 = smul.addr %s328, 128
          %s330 = scalar_lea.hbm %s2, %s329
          %s332 = sshll.u32 %s324, 4
          %s333 = int_to_ptr.vmem [resolvable:$true] %s332
          %335 = dma.hbm_to_vmem [thread:$0]  %s330, 512, %s333, %s321
        $region44: #{tpu_custom_call.1} parent=31 // pred_fallthru
          _
      $region32: #{tpu_custom_call.1} parent=5 // pred_fallthru
        _
      %p336 = scmp.le.s32.totalorder 1, %s24
      %p337 = scmp.lt.s32.totalorder %s24, 3
      %p338 = pnand %p336, %p337
      %p339 = pneg %p338
      // Predicated region
      $region45: #{tpu_custom_call.1} parent=5 // pred_check
        _
      $region46: #{tpu_custom_call.1} parent=5 // pred_check_branch
        %341 = sbr.rel (%p338) target = $region48
      $region47: #{tpu_custom_call.1} parent=5 // pred_region
        %s342 = ssub.s32 %s24, 1
        %s343 = sand.u32 %s37, 1
        %s344 = scalar_lea.sflag [#allocation6], %s343
        %s345 = sand.u32 %s37, 1
        %s346 = smul.addr %s345, 32
        %s347 = scalar_lea.vmem [#allocation5], %s346
        // Predicated region
        $region49: #{tpu_custom_call.1} parent=47 // pred_check
          %p348 = pneg %p50
        $region50: #{tpu_custom_call.1} parent=47 // pred_check_branch
          %350 = sbr.rel (%p348) target = $region52
        $region51: #{tpu_custom_call.1} parent=47 // pred_region
          %351 = dma.done %s344, 512
        $region52: #{tpu_custom_call.1} parent=47 // pred_fallthru
          _
        %s352 = sand.u32 %s29, 1
        %s353 = scalar_lea.sflag [#allocation9], %s352
        %s354 = sand.u32 %s63, 1
        %s355 = smul.addr %s354, 32
        %s356 = scalar_lea.vmem [#allocation8], %s355
        // Predicated region
        $region53: #{tpu_custom_call.1} parent=47 // pred_check
          %p357 = pneg %p76
        $region54: #{tpu_custom_call.1} parent=47 // pred_check_branch
          %359 = sbr.rel (%p357) target = $region56
        $region55: #{tpu_custom_call.1} parent=47 // pred_region
          %360 = dma.done %s353, 512
        $region56: #{tpu_custom_call.1} parent=47 // pred_fallthru
          _
        %s361 = sand.u32 %s29, 1
        %s362 = scalar_lea.sflag [#allocation9], %s361
        %s363 = sand.u32 %s89, 1
        %s364 = smul.addr %s363, 32
        %s365 = scalar_lea.vmem [#allocation10], %s364
        // Predicated region
        $region57: #{tpu_custom_call.1} parent=47 // pred_check
          %p366 = pneg %p102
        $region58: #{tpu_custom_call.1} parent=47 // pred_check_branch
          %368 = sbr.rel (%p366) target = $region60
        $region59: #{tpu_custom_call.1} parent=47 // pred_region
          %369 = dma.done %s362, 512
        $region60: #{tpu_custom_call.1} parent=47 // pred_fallthru
          _
        // Predicated region
        $region61: #{tpu_custom_call.1} parent=47 // pred_check
          %p370 = pneg %p123
        $region62: #{tpu_custom_call.1} parent=47 // pred_check_branch
          %372 = sbr.rel (%p370) target = $region64
        $region63: #{tpu_custom_call.1} parent=47 // pred_region
          %373 = dma.done [#allocation12], 16384
        $region64: #{tpu_custom_call.1} parent=47 // pred_fallthru
          _
        // Predicated region
        $region65: #{tpu_custom_call.1} parent=47 // pred_check
          %p374 = pneg %p144
        $region66: #{tpu_custom_call.1} parent=47 // pred_check_branch
          %376 = sbr.rel (%p374) target = $region68
        $region67: #{tpu_custom_call.1} parent=47 // pred_region
          %377 = dma.done [#allocation12], 64
        $region68: #{tpu_custom_call.1} parent=47 // pred_fallthru
          _
        // Predicated region
        $region69: #{tpu_custom_call.1} parent=47 // pred_check
          %p378 = pneg %p165
        $region70: #{tpu_custom_call.1} parent=47 // pred_check_branch
          %380 = sbr.rel (%p378) target = $region72
        $region71: #{tpu_custom_call.1} parent=47 // pred_region
          %381 = dma.done [#allocation15], 16384
        $region72: #{tpu_custom_call.1} parent=47 // pred_fallthru
          _
        // Predicated region
        $region73: #{tpu_custom_call.1} parent=47 // pred_check
          %p382 = pneg %p186
        $region74: #{tpu_custom_call.1} parent=47 // pred_check_branch
          %384 = sbr.rel (%p382) target = $region76
        $region75: #{tpu_custom_call.1} parent=47 // pred_region
          %385 = dma.done [#allocation15], 64
        $region76: #{tpu_custom_call.1} parent=47 // pred_fallthru
          _
        %s386 = sand.u32 %s37, 1
        %s387 = scalar_lea.sflag [#allocation6], %s386
        %s388 = sand.u32 %s37, 1
        %s389 = smul.addr %s388, 32
        %s390 = scalar_lea.vmem [#allocation5], %s389
        %p391 = pneg %p50
        %p392 = pneg %p47
        %s393 = sand.u32 %s29, 1
        %s394 = scalar_lea.sflag [#allocation9], %s393
        %s395 = sand.u32 %s63, 1
        %s396 = smul.addr %s395, 32
        %s397 = scalar_lea.vmem [#allocation8], %s396
        %p398 = pneg %p76
        %p399 = pneg %p73
        %s400 = sand.u32 %s29, 1
        %s401 = scalar_lea.sflag [#allocation9], %s400
        %s402 = sand.u32 %s89, 1
        %s403 = smul.addr %s402, 32
        %s404 = scalar_lea.vmem [#allocation10], %s403
        %p405 = pneg %p102
        %p406 = pneg %p99
        %p407 = pneg %p123
        %p408 = pneg %p120
        %p409 = pneg %p144
        %p410 = pneg %p141
        %p411 = pneg %p165
        %p412 = pneg %p162
        %p413 = pneg %p186
        %p414 = pneg %p183
        %p415 = pneg %p212
        %p416 = pneg %p209
        %s417 = sand.u32 %s199, 1
        %s418 = scalar_lea.sflag [#allocation7], %s417
        %s419 = sand.u32 %s199, 1
        %s420 = smul.addr %s419, 32
        %s421 = scalar_lea.vmem [#allocation17], %s420
        %v423 = vld [vmem:[%s347] sm:$0xff]
        %v424 = vld [vmem:[%s347 + $0x8] sm:$0xff]
        %v425 = vld [vmem:[%s347 + $0x10] sm:$0xff]
        %v426 = vld [vmem:[%s347 + $0x18] sm:$0xff]
        %v427 = vpack.c.bf16 %v423, %v423
        %v428 = vpack.c.bf16 %v424, %v424
        %v429 = vpack.c.bf16 %v425, %v425
        %v430 = vpack.c.bf16 %v426, %v426
        %v435 = vunpack.c.l.b16 %v427
        %v436 = vunpack.c.l.b16 %v428
        %v437 = vunpack.c.l.b16 %v429
        %v438 = vunpack.c.l.b16 %v430
        %v439 = vpack.c.b16 %v436, %v435
        %v440 = vpack.c.b16 %v438, %v437
        %443 = vst [vmem:[#allocation2] sm:$0xff] %v439
        %444 = vst [vmem:[#allocation2 + $0x8] sm:$0xff] %v440
        %v445 = vld [vmem:[%s356] sm:$0xff]
        %v446 = vld [vmem:[%s356 + $0x8] sm:$0xff]
        %v447 = vld [vmem:[%s356 + $0x10] sm:$0xff]
        %v448 = vld [vmem:[%s356 + $0x18] sm:$0xff]
        %v449 = vpack.c.bf16 %v445, %v445
        %v450 = vpack.c.bf16 %v446, %v446
        %v451 = vpack.c.bf16 %v447, %v447
        %v452 = vpack.c.bf16 %v448, %v448
        %v457 = vunpack.c.l.b16 %v449
        %v458 = vunpack.c.l.b16 %v450
        %v459 = vunpack.c.l.b16 %v451
        %v460 = vunpack.c.l.b16 %v452
        %v461 = vpack.c.b16 %v458, %v457
        %v462 = vpack.c.b16 %v460, %v459
        %465 = vst [vmem:[#allocation2 + $0x10] sm:$0xff] %v461
        %466 = vst [vmem:[#allocation2 + $0x18] sm:$0xff] %v462
        %v467 = vld [vmem:[%s365] sm:$0xff]
        %v468 = vld [vmem:[%s365 + $0x8] sm:$0xff]
        %v469 = vld [vmem:[%s365 + $0x10] sm:$0xff]
        %v470 = vld [vmem:[%s365 + $0x18] sm:$0xff]
        %v471 = vpack.c.bf16 %v467, %v467
        %v472 = vpack.c.bf16 %v468, %v468
        %v473 = vpack.c.bf16 %v469, %v469
        %v474 = vpack.c.bf16 %v470, %v470
        %v479 = vunpack.c.l.b16 %v471
        %v480 = vunpack.c.l.b16 %v472
        %v481 = vunpack.c.l.b16 %v473
        %v482 = vunpack.c.l.b16 %v474
        %v483 = vpack.c.b16 %v480, %v479
        %v484 = vpack.c.b16 %v482, %v481
        %487 = vst [vmem:[#allocation2 + $0x20] sm:$0xff] %v483
        %488 = vst [vmem:[#allocation2 + $0x28] sm:$0xff] %v484
        %v489 = vld [vmem:[#allocation2] sm:$0xff]
        %v490 = vld [vmem:[#allocation2 + $0x8] sm:$0xff]
        %v491 = vld [vmem:[#allocation2 + $0x10] sm:$0xff]
        %v492 = vld [vmem:[#allocation2 + $0x18] sm:$0xff]
        %v493 = vld [vmem:[#allocation2 + $0x20] sm:$0xff]
        %v494 = vld [vmem:[#allocation2 + $0x28] sm:$0xff]
        %v495 = vld [vmem:[#allocation11] sm:$0xff]
        %v496 = vld [vmem:[#allocation11 + $0x8] sm:$0xff]
        %v497 = vld [vmem:[#allocation11 + $0x10] sm:$0xff]
        %v498 = vld [vmem:[#allocation11 + $0x18] sm:$0xff]
        %v499 = vld [vmem:[#allocation11 + $0x20] sm:$0xff]
        %v500 = vld [vmem:[#allocation11 + $0x28] sm:$0xff]
        %v501 = vld [vmem:[#allocation11 + $0x30] sm:$0xff]
        %v502 = vld [vmem:[#allocation11 + $0x38] sm:$0xff]
        %v503 = vld [vmem:[#allocation11 + $0x40] sm:$0xff]
        %v504 = vld [vmem:[#allocation11 + $0x48] sm:$0xff]
        %v505 = vld [vmem:[#allocation11 + $0x50] sm:$0xff]
        %v506 = vld [vmem:[#allocation11 + $0x58] sm:$0xff]
        %v507 = vld [vmem:[#allocation11 + $0x60] sm:$0xff]
        %v508 = vld [vmem:[#allocation11 + $0x68] sm:$0xff]
        %v509 = vld [vmem:[#allocation11 + $0x70] sm:$0xff]
        %v510 = vld [vmem:[#allocation11 + $0x78] sm:$0xff]
        %v511 = vld [vmem:[#allocation11 + $0x80] sm:$0xff]
        %v512 = vld [vmem:[#allocation11 + $0x88] sm:$0xff]
        %v513 = vld [vmem:[#allocation11 + $0x90] sm:$0xff]
        %v514 = vld [vmem:[#allocation11 + $0x98] sm:$0xff]
        %v515 = vld [vmem:[#allocation11 + $0xa0] sm:$0xff]
        %v516 = vld [vmem:[#allocation11 + $0xa8] sm:$0xff]
        %v517 = vld [vmem:[#allocation11 + $0xb0] sm:$0xff]
        %v518 = vld [vmem:[#allocation11 + $0xb8] sm:$0xff]
        %v519 = vld [vmem:[#allocation11 + $0xc0] sm:$0xff]
        %v520 = vld [vmem:[#allocation11 + $0xc8] sm:$0xff]
        %v521 = vld [vmem:[#allocation11 + $0xd0] sm:$0xff]
        %v522 = vld [vmem:[#allocation11 + $0xd8] sm:$0xff]
        %v523 = vld [vmem:[#allocation11 + $0xe0] sm:$0xff]
        %v524 = vld [vmem:[#allocation11 + $0xe8] sm:$0xff]
        %v525 = vld [vmem:[#allocation11 + $0xf0] sm:$0xff]
        %v526 = vld [vmem:[#allocation11 + $0xf8] sm:$0xff]
        %v527 = vld [vmem:[#allocation11 + $0x100] sm:$0xff]
        %v528 = vld [vmem:[#allocation11 + $0x108] sm:$0xff]
        %v529 = vld [vmem:[#allocation11 + $0x110] sm:$0xff]
        %v530 = vld [vmem:[#allocation11 + $0x118] sm:$0xff]
        %v531 = vld [vmem:[#allocation11 + $0x120] sm:$0xff]
        %v532 = vld [vmem:[#allocation11 + $0x128] sm:$0xff]
        %v533 = vld [vmem:[#allocation11 + $0x130] sm:$0xff]
        %v534 = vld [vmem:[#allocation11 + $0x138] sm:$0xff]
        %v535 = vld [vmem:[#allocation11 + $0x140] sm:$0xff]
        %v536 = vld [vmem:[#allocation11 + $0x148] sm:$0xff]
        %v537 = vld [vmem:[#allocation11 + $0x150] sm:$0xff]
        %v538 = vld [vmem:[#allocation11 + $0x158] sm:$0xff]
        %v539 = vld [vmem:[#allocation11 + $0x160] sm:$0xff]
        %v540 = vld [vmem:[#allocation11 + $0x168] sm:$0xff]
        %v541 = vld [vmem:[#allocation11 + $0x170] sm:$0xff]
        %v542 = vld [vmem:[#allocation11 + $0x178] sm:$0xff]
        %v543 = vld [vmem:[#allocation11 + $0x180] sm:$0xff]
        %v544 = vld [vmem:[#allocation11 + $0x188] sm:$0xff]
        %v545 = vld [vmem:[#allocation11 + $0x190] sm:$0xff]
        %v546 = vld [vmem:[#allocation11 + $0x198] sm:$0xff]
        %v547 = vld [vmem:[#allocation11 + $0x1a0] sm:$0xff]
        %v548 = vld [vmem:[#allocation11 + $0x1a8] sm:$0xff]
        %v549 = vld [vmem:[#allocation11 + $0x1b0] sm:$0xff]
        %v550 = vld [vmem:[#allocation11 + $0x1b8] sm:$0xff]
        %v551 = vld [vmem:[#allocation11 + $0x1c0] sm:$0xff]
        %v552 = vld [vmem:[#allocation11 + $0x1c8] sm:$0xff]
        %v553 = vld [vmem:[#allocation11 + $0x1d0] sm:$0xff]
        %v554 = vld [vmem:[#allocation11 + $0x1d8] sm:$0xff]
        %v555 = vld [vmem:[#allocation11 + $0x1e0] sm:$0xff]
        %v556 = vld [vmem:[#allocation11 + $0x1e8] sm:$0xff]
        %v557 = vld [vmem:[#allocation11 + $0x1f0] sm:$0xff]
        %v558 = vld [vmem:[#allocation11 + $0x1f8] sm:$0xff]
        %v559 = vld [vmem:[#allocation11 + $0x200] sm:$0xff]
        %v560 = vld [vmem:[#allocation11 + $0x208] sm:$0xff]
        %v561 = vld [vmem:[#allocation11 + $0x210] sm:$0xff]
        %v562 = vld [vmem:[#allocation11 + $0x218] sm:$0xff]
        %v563 = vld [vmem:[#allocation11 + $0x220] sm:$0xff]
        %v564 = vld [vmem:[#allocation11 + $0x228] sm:$0xff]
        %v565 = vld [vmem:[#allocation11 + $0x230] sm:$0xff]
        %v566 = vld [vmem:[#allocation11 + $0x238] sm:$0xff]
        %v567 = vld [vmem:[#allocation11 + $0x240] sm:$0xff]
        %v568 = vld [vmem:[#allocation11 + $0x248] sm:$0xff]
        %v569 = vld [vmem:[#allocation11 + $0x250] sm:$0xff]
        %v570 = vld [vmem:[#allocation11 + $0x258] sm:$0xff]
        %v571 = vld [vmem:[#allocation11 + $0x260] sm:$0xff]
        %v572 = vld [vmem:[#allocation11 + $0x268] sm:$0xff]
        %v573 = vld [vmem:[#allocation11 + $0x270] sm:$0xff]
        %v574 = vld [vmem:[#allocation11 + $0x278] sm:$0xff]
        %v575 = vld [vmem:[#allocation11 + $0x280] sm:$0xff]
        %v576 = vld [vmem:[#allocation11 + $0x288] sm:$0xff]
        %v577 = vld [vmem:[#allocation11 + $0x290] sm:$0xff]
        %v578 = vld [vmem:[#allocation11 + $0x298] sm:$0xff]
        %v579 = vld [vmem:[#allocation11 + $0x2a0] sm:$0xff]
        %v580 = vld [vmem:[#allocation11 + $0x2a8] sm:$0xff]
        %v581 = vld [vmem:[#allocation11 + $0x2b0] sm:$0xff]
        %v582 = vld [vmem:[#allocation11 + $0x2b8] sm:$0xff]
        %v583 = vld [vmem:[#allocation11 + $0x2c0] sm:$0xff]
        %v584 = vld [vmem:[#allocation11 + $0x2c8] sm:$0xff]
        %v585 = vld [vmem:[#allocation11 + $0x2d0] sm:$0xff]
        %v586 = vld [vmem:[#allocation11 + $0x2d8] sm:$0xff]
        %v587 = vld [vmem:[#allocation11 + $0x2e0] sm:$0xff]
        %v588 = vld [vmem:[#allocation11 + $0x2e8] sm:$0xff]
        %v589 = vld [vmem:[#allocation11 + $0x2f0] sm:$0xff]
        %v590 = vld [vmem:[#allocation11 + $0x2f8] sm:$0xff]
        %v591 = vld [vmem:[#allocation11 + $0x300] sm:$0xff]
        %v592 = vld [vmem:[#allocation11 + $0x308] sm:$0xff]
        %v593 = vld [vmem:[#allocation11 + $0x310] sm:$0xff]
        %v594 = vld [vmem:[#allocation11 + $0x318] sm:$0xff]
        %v595 = vld [vmem:[#allocation11 + $0x320] sm:$0xff]
        %v596 = vld [vmem:[#allocation11 + $0x328] sm:$0xff]
        %v597 = vld [vmem:[#allocation11 + $0x330] sm:$0xff]
        %v598 = vld [vmem:[#allocation11 + $0x338] sm:$0xff]
        %v599 = vld [vmem:[#allocation11 + $0x340] sm:$0xff]
        %v600 = vld [vmem:[#allocation11 + $0x348] sm:$0xff]
        %v601 = vld [vmem:[#allocation11 + $0x350] sm:$0xff]
        %v602 = vld [vmem:[#allocation11 + $0x358] sm:$0xff]
        %v603 = vld [vmem:[#allocation11 + $0x360] sm:$0xff]
        %v604 = vld [vmem:[#allocation11 + $0x368] sm:$0xff]
        %v605 = vld [vmem:[#allocation11 + $0x370] sm:$0xff]
        %v606 = vld [vmem:[#allocation11 + $0x378] sm:$0xff]
        %v607 = vld [vmem:[#allocation11 + $0x380] sm:$0xff]
        %v608 = vld [vmem:[#allocation11 + $0x388] sm:$0xff]
        %v609 = vld [vmem:[#allocation11 + $0x390] sm:$0xff]
        %v610 = vld [vmem:[#allocation11 + $0x398] sm:$0xff]
        %v611 = vld [vmem:[#allocation11 + $0x3a0] sm:$0xff]
        %v612 = vld [vmem:[#allocation11 + $0x3a8] sm:$0xff]
        %v613 = vld [vmem:[#allocation11 + $0x3b0] sm:$0xff]
        %v614 = vld [vmem:[#allocation11 + $0x3b8] sm:$0xff]
        %v615 = vld [vmem:[#allocation11 + $0x3c0] sm:$0xff]
        %v616 = vld [vmem:[#allocation11 + $0x3c8] sm:$0xff]
        %v617 = vld [vmem:[#allocation11 + $0x3d0] sm:$0xff]
        %v618 = vld [vmem:[#allocation11 + $0x3d8] sm:$0xff]
        %v619 = vld [vmem:[#allocation11 + $0x3e0] sm:$0xff]
        %v620 = vld [vmem:[#allocation11 + $0x3e8] sm:$0xff]
        %v621 = vld [vmem:[#allocation11 + $0x3f0] sm:$0xff]
        %v622 = vld [vmem:[#allocation11 + $0x3f8] sm:$0xff]
        %v623 = vld [vmem:[#allocation13] sm:$0xf]
        %v625 = vlaneseq
        %v626 = vshrl.u32 %v625, 7
        %v627 = vsub.s32 0, %v626
        %v628 = vrot.slane %v623, %v627
        %v629 = vlaneseq
        %v630 = vshrl.u32 %v629, 7
        %v631 = vsub.s32 1, %v630
        %v632 = vrot.slane %v623, %v631
        %v633 = vlaneseq
        %v634 = vshrl.u32 %v633, 7
        %v635 = vsub.s32 2, %v634
        %v636 = vrot.slane %v623, %v635
        %v637 = vlaneseq
        %v638 = vshrl.u32 %v637, 7
        %v639 = vsub.s32 3, %v638
        %v640 = vrot.slane %v623, %v639
        %v651 = vunpack.c.l.b16 %v489
        %v652 = vunpack.c.h.b16 %v489
        %v653 = vunpack.c.l.b16 %v490
        %v654 = vunpack.c.h.b16 %v490
        %v655 = vunpack.c.l.b16 %v491
        %v656 = vunpack.c.h.b16 %v491
        %v657 = vunpack.c.l.b16 %v492
        %v658 = vunpack.c.h.b16 %v492
        %v659 = vunpack.c.l.b16 %v493
        %v660 = vunpack.c.h.b16 %v493
        %v661 = vunpack.c.l.b16 %v494
        %v662 = vunpack.c.h.b16 %v494
        %v663 = vpack.c.b16 %v655, %v651
        %v664 = vpack.c.b16 %v656, %v652
        %v665 = vpack.c.b16 %v657, %v653
        %v666 = vpack.c.b16 %v658, %v654
        %v667 = vpack.c.b16 %v659, %v659
        %v668 = vpack.c.b16 %v660, %v660
        %v669 = vpack.c.b16 %v661, %v661
        %v670 = vpack.c.b16 %v662, %v662
        %v807 = vunpack.c.l.b16 %v495
        %v808 = vunpack.c.h.b16 %v495
        %v809 = vunpack.c.l.b16 %v496
        %v810 = vunpack.c.h.b16 %v496
        %v811 = vunpack.c.l.b16 %v497
        %v812 = vunpack.c.h.b16 %v497
        %v813 = vunpack.c.l.b16 %v498
        %v814 = vunpack.c.h.b16 %v498
        %v815 = vunpack.c.l.b16 %v499
        %v816 = vunpack.c.h.b16 %v499
        %v817 = vunpack.c.l.b16 %v500
        %v818 = vunpack.c.h.b16 %v500
        %v819 = vunpack.c.l.b16 %v501
        %v820 = vunpack.c.h.b16 %v501
        %v821 = vunpack.c.l.b16 %v502
        %v822 = vunpack.c.h.b16 %v502
        %v823 = vunpack.c.l.b16 %v503
        %v824 = vunpack.c.h.b16 %v503
        %v825 = vunpack.c.l.b16 %v504
        %v826 = vunpack.c.h.b16 %v504
        %v827 = vunpack.c.l.b16 %v505
        %v828 = vunpack.c.h.b16 %v505
        %v829 = vunpack.c.l.b16 %v506
        %v830 = vunpack.c.h.b16 %v506
        %v831 = vunpack.c.l.b16 %v507
        %v832 = vunpack.c.h.b16 %v507
        %v833 = vunpack.c.l.b16 %v508
        %v834 = vunpack.c.h.b16 %v508
        %v835 = vunpack.c.l.b16 %v509
        %v836 = vunpack.c.h.b16 %v509
        %v837 = vunpack.c.l.b16 %v510
        %v838 = vunpack.c.h.b16 %v510
        %v839 = vunpack.c.l.b16 %v511
        %v840 = vunpack.c.h.b16 %v511
        %v841 = vunpack.c.l.b16 %v512
        %v842 = vunpack.c.h.b16 %v512
        %v843 = vunpack.c.l.b16 %v513
        %v844 = vunpack.c.h.b16 %v513
        %v845 = vunpack.c.l.b16 %v514
        %v846 = vunpack.c.h.b16 %v514
        %v847 = vunpack.c.l.b16 %v515
        %v848 = vunpack.c.h.b16 %v515
        %v849 = vunpack.c.l.b16 %v516
        %v850 = vunpack.c.h.b16 %v516
        %v851 = vunpack.c.l.b16 %v517
        %v852 = vunpack.c.h.b16 %v517
        %v853 = vunpack.c.l.b16 %v518
        %v854 = vunpack.c.h.b16 %v518
        %v855 = vunpack.c.l.b16 %v519
        %v856 = vunpack.c.h.b16 %v519
        %v857 = vunpack.c.l.b16 %v520
        %v858 = vunpack.c.h.b16 %v520
        %v859 = vunpack.c.l.b16 %v521
        %v860 = vunpack.c.h.b16 %v521
        %v861 = vunpack.c.l.b16 %v522
        %v862 = vunpack.c.h.b16 %v522
        %v863 = vunpack.c.l.b16 %v523
        %v864 = vunpack.c.h.b16 %v523
        %v865 = vunpack.c.l.b16 %v524
        %v866 = vunpack.c.h.b16 %v524
        %v867 = vunpack.c.l.b16 %v525
        %v868 = vunpack.c.h.b16 %v525
        %v869 = vunpack.c.l.b16 %v526
        %v870 = vunpack.c.h.b16 %v526
        %v871 = vunpack.c.l.b16 %v527
        %v872 = vunpack.c.h.b16 %v527
        %v873 = vunpack.c.l.b16 %v528
        %v874 = vunpack.c.h.b16 %v528
        %v875 = vunpack.c.l.b16 %v529
        %v876 = vunpack.c.h.b16 %v529
        %v877 = vunpack.c.l.b16 %v530
        %v878 = vunpack.c.h.b16 %v530
        %v879 = vunpack.c.l.b16 %v531
        %v880 = vunpack.c.h.b16 %v531
        %v881 = vunpack.c.l.b16 %v532
        %v882 = vunpack.c.h.b16 %v532
        %v883 = vunpack.c.l.b16 %v533
        %v884 = vunpack.c.h.b16 %v533
        %v885 = vunpack.c.l.b16 %v534
        %v886 = vunpack.c.h.b16 %v534
        %v887 = vunpack.c.l.b16 %v535
        %v888 = vunpack.c.h.b16 %v535
        %v889 = vunpack.c.l.b16 %v536
        %v890 = vunpack.c.h.b16 %v536
        %v891 = vunpack.c.l.b16 %v537
        %v892 = vunpack.c.h.b16 %v537
        %v893 = vunpack.c.l.b16 %v538
        %v894 = vunpack.c.h.b16 %v538
        %v895 = vunpack.c.l.b16 %v539
        %v896 = vunpack.c.h.b16 %v539
        %v897 = vunpack.c.l.b16 %v540
        %v898 = vunpack.c.h.b16 %v540
        %v899 = vunpack.c.l.b16 %v541
        %v900 = vunpack.c.h.b16 %v541
        %v901 = vunpack.c.l.b16 %v542
        %v902 = vunpack.c.h.b16 %v542
        %v903 = vunpack.c.l.b16 %v543
        %v904 = vunpack.c.h.b16 %v543
        %v905 = vunpack.c.l.b16 %v544
        %v906 = vunpack.c.h.b16 %v544
        %v907 = vunpack.c.l.b16 %v545
        %v908 = vunpack.c.h.b16 %v545
        %v909 = vunpack.c.l.b16 %v546
        %v910 = vunpack.c.h.b16 %v546
        %v911 = vunpack.c.l.b16 %v547
        %v912 = vunpack.c.h.b16 %v547
        %v913 = vunpack.c.l.b16 %v548
        %v914 = vunpack.c.h.b16 %v548
        %v915 = vunpack.c.l.b16 %v549
        %v916 = vunpack.c.h.b16 %v549
        %v917 = vunpack.c.l.b16 %v550
        %v918 = vunpack.c.h.b16 %v550
        %v919 = vunpack.c.l.b16 %v551
        %v920 = vunpack.c.h.b16 %v551
        %v921 = vunpack.c.l.b16 %v552
        %v922 = vunpack.c.h.b16 %v552
        %v923 = vunpack.c.l.b16 %v553
        %v924 = vunpack.c.h.b16 %v553
        %v925 = vunpack.c.l.b16 %v554
        %v926 = vunpack.c.h.b16 %v554
        %v927 = vunpack.c.l.b16 %v555
        %v928 = vunpack.c.h.b16 %v555
        %v929 = vunpack.c.l.b16 %v556
        %v930 = vunpack.c.h.b16 %v556
        %v931 = vunpack.c.l.b16 %v557
        %v932 = vunpack.c.h.b16 %v557
        %v933 = vunpack.c.l.b16 %v558
        %v934 = vunpack.c.h.b16 %v558
        %v935 = vunpack.c.l.b16 %v559
        %v936 = vunpack.c.h.b16 %v559
        %v937 = vunpack.c.l.b16 %v560
        %v938 = vunpack.c.h.b16 %v560
        %v939 = vunpack.c.l.b16 %v561
        %v940 = vunpack.c.h.b16 %v561
        %v941 = vunpack.c.l.b16 %v562
        %v942 = vunpack.c.h.b16 %v562
        %v943 = vunpack.c.l.b16 %v563
        %v944 = vunpack.c.h.b16 %v563
        %v945 = vunpack.c.l.b16 %v564
        %v946 = vunpack.c.h.b16 %v564
        %v947 = vunpack.c.l.b16 %v565
        %v948 = vunpack.c.h.b16 %v565
        %v949 = vunpack.c.l.b16 %v566
        %v950 = vunpack.c.h.b16 %v566
        %v951 = vunpack.c.l.b16 %v567
        %v952 = vunpack.c.h.b16 %v567
        %v953 = vunpack.c.l.b16 %v568
        %v954 = vunpack.c.h.b16 %v568
        %v955 = vunpack.c.l.b16 %v569
        %v956 = vunpack.c.h.b16 %v569
        %v957 = vunpack.c.l.b16 %v570
        %v958 = vunpack.c.h.b16 %v570
        %v959 = vunpack.c.l.b16 %v571
        %v960 = vunpack.c.h.b16 %v571
        %v961 = vunpack.c.l.b16 %v572
        %v962 = vunpack.c.h.b16 %v572
        %v963 = vunpack.c.l.b16 %v573
        %v964 = vunpack.c.h.b16 %v573
        %v965 = vunpack.c.l.b16 %v574
        %v966 = vunpack.c.h.b16 %v574
        %v967 = vunpack.c.l.b16 %v575
        %v968 = vunpack.c.h.b16 %v575
        %v969 = vunpack.c.l.b16 %v576
        %v970 = vunpack.c.h.b16 %v576
        %v971 = vunpack.c.l.b16 %v577
        %v972 = vunpack.c.h.b16 %v577
        %v973 = vunpack.c.l.b16 %v578
        %v974 = vunpack.c.h.b16 %v578
        %v975 = vunpack.c.l.b16 %v579
        %v976 = vunpack.c.h.b16 %v579
        %v977 = vunpack.c.l.b16 %v580
        %v978 = vunpack.c.h.b16 %v580
        %v979 = vunpack.c.l.b16 %v581
        %v980 = vunpack.c.h.b16 %v581
        %v981 = vunpack.c.l.b16 %v582
        %v982 = vunpack.c.h.b16 %v582
        %v983 = vunpack.c.l.b16 %v583
        %v984 = vunpack.c.h.b16 %v583
        %v985 = vunpack.c.l.b16 %v584
        %v986 = vunpack.c.h.b16 %v584
        %v987 = vunpack.c.l.b16 %v585
        %v988 = vunpack.c.h.b16 %v585
        %v989 = vunpack.c.l.b16 %v586
        %v990 = vunpack.c.h.b16 %v586
        %v991 = vunpack.c.l.b16 %v587
        %v992 = vunpack.c.h.b16 %v587
        %v993 = vunpack.c.l.b16 %v588
        %v994 = vunpack.c.h.b16 %v588
        %v995 = vunpack.c.l.b16 %v589
        %v996 = vunpack.c.h.b16 %v589
        %v997 = vunpack.c.l.b16 %v590
        %v998 = vunpack.c.h.b16 %v590
        %v999 = vunpack.c.l.b16 %v591
        %v1000 = vunpack.c.h.b16 %v591
        %v1001 = vunpack.c.l.b16 %v592
        %v1002 = vunpack.c.h.b16 %v592
        %v1003 = vunpack.c.l.b16 %v593
        %v1004 = vunpack.c.h.b16 %v593
        %v1005 = vunpack.c.l.b16 %v594
        %v1006 = vunpack.c.h.b16 %v594
        %v1007 = vunpack.c.l.b16 %v595
        %v1008 = vunpack.c.h.b16 %v595
        %v1009 = vunpack.c.l.b16 %v596
        %v1010 = vunpack.c.h.b16 %v596
        %v1011 = vunpack.c.l.b16 %v597
        %v1012 = vunpack.c.h.b16 %v597
        %v1013 = vunpack.c.l.b16 %v598
        %v1014 = vunpack.c.h.b16 %v598
        %v1015 = vunpack.c.l.b16 %v599
        %v1016 = vunpack.c.h.b16 %v599
        %v1017 = vunpack.c.l.b16 %v600
        %v1018 = vunpack.c.h.b16 %v600
        %v1019 = vunpack.c.l.b16 %v601
        %v1020 = vunpack.c.h.b16 %v601
        %v1021 = vunpack.c.l.b16 %v602
        %v1022 = vunpack.c.h.b16 %v602
        %v1023 = vunpack.c.l.b16 %v603
        %v1024 = vunpack.c.h.b16 %v603
        %v1025 = vunpack.c.l.b16 %v604
        %v1026 = vunpack.c.h.b16 %v604
        %v1027 = vunpack.c.l.b16 %v605
        %v1028 = vunpack.c.h.b16 %v605
        %v1029 = vunpack.c.l.b16 %v606
        %v1030 = vunpack.c.h.b16 %v606
        %v1031 = vunpack.c.l.b16 %v607
        %v1032 = vunpack.c.h.b16 %v607
        %v1033 = vunpack.c.l.b16 %v608
        %v1034 = vunpack.c.h.b16 %v608
        %v1035 = vunpack.c.l.b16 %v609
        %v1036 = vunpack.c.h.b16 %v609
        %v1037 = vunpack.c.l.b16 %v610
        %v1038 = vunpack.c.h.b16 %v610
        %v1039 = vunpack.c.l.b16 %v611
        %v1040 = vunpack.c.h.b16 %v611
        %v1041 = vunpack.c.l.b16 %v612
        %v1042 = vunpack.c.h.b16 %v612
        %v1043 = vunpack.c.l.b16 %v613
        %v1044 = vunpack.c.h.b16 %v613
        %v1045 = vunpack.c.l.b16 %v614
        %v1046 = vunpack.c.h.b16 %v614
        %v1047 = vunpack.c.l.b16 %v615
        %v1048 = vunpack.c.h.b16 %v615
        %v1049 = vunpack.c.l.b16 %v616
        %v1050 = vunpack.c.h.b16 %v616
        %v1051 = vunpack.c.l.b16 %v617
        %v1052 = vunpack.c.h.b16 %v617
        %v1053 = vunpack.c.l.b16 %v618
        %v1054 = vunpack.c.h.b16 %v618
        %v1055 = vunpack.c.l.b16 %v619
        %v1056 = vunpack.c.h.b16 %v619
        %v1057 = vunpack.c.l.b16 %v620
        %v1058 = vunpack.c.h.b16 %v620
        %v1059 = vunpack.c.l.b16 %v621
        %v1060 = vunpack.c.h.b16 %v621
        %v1061 = vunpack.c.l.b16 %v622
        %v1062 = vunpack.c.h.b16 %v622
        %v1063 = vpack.c.b16 %v811, %v807
        %v1064 = vpack.c.b16 %v812, %v808
        %v1065 = vpack.c.b16 %v813, %v809
        %v1066 = vpack.c.b16 %v814, %v810
        %v1067 = vpack.c.b16 %v819, %v815
        %v1068 = vpack.c.b16 %v820, %v816
        %v1069 = vpack.c.b16 %v821, %v817
        %v1070 = vpack.c.b16 %v822, %v818
        %v1071 = vpack.c.b16 %v827, %v823
        %v1072 = vpack.c.b16 %v828, %v824
        %v1073 = vpack.c.b16 %v829, %v825
        %v1074 = vpack.c.b16 %v830, %v826
        %v1075 = vpack.c.b16 %v835, %v831
        %v1076 = vpack.c.b16 %v836, %v832
        %v1077 = vpack.c.b16 %v837, %v833
        %v1078 = vpack.c.b16 %v838, %v834
        %v1079 = vpack.c.b16 %v843, %v839
        %v1080 = vpack.c.b16 %v844, %v840
        %v1081 = vpack.c.b16 %v845, %v841
        %v1082 = vpack.c.b16 %v846, %v842
        %v1083 = vpack.c.b16 %v851, %v847
        %v1084 = vpack.c.b16 %v852, %v848
        %v1085 = vpack.c.b16 %v853, %v849
        %v1086 = vpack.c.b16 %v854, %v850
        %v1087 = vpack.c.b16 %v859, %v855
        %v1088 = vpack.c.b16 %v860, %v856
        %v1089 = vpack.c.b16 %v861, %v857
        %v1090 = vpack.c.b16 %v862, %v858
        %v1091 = vpack.c.b16 %v867, %v863
        %v1092 = vpack.c.b16 %v868, %v864
        %v1093 = vpack.c.b16 %v869, %v865
        %v1094 = vpack.c.b16 %v870, %v866
        %v1095 = vpack.c.b16 %v875, %v871
        %v1096 = vpack.c.b16 %v876, %v872
        %v1097 = vpack.c.b16 %v877, %v873
        %v1098 = vpack.c.b16 %v878, %v874
        %v1099 = vpack.c.b16 %v883, %v879
        %v1100 = vpack.c.b16 %v884, %v880
        %v1101 = vpack.c.b16 %v885, %v881
        %v1102 = vpack.c.b16 %v886, %v882
        %v1103 = vpack.c.b16 %v891, %v887
        %v1104 = vpack.c.b16 %v892, %v888
        %v1105 = vpack.c.b16 %v893, %v889
        %v1106 = vpack.c.b16 %v894, %v890
        %v1107 = vpack.c.b16 %v899, %v895
        %v1108 = vpack.c.b16 %v900, %v896
        %v1109 = vpack.c.b16 %v901, %v897
        %v1110 = vpack.c.b16 %v902, %v898
        %v1111 = vpack.c.b16 %v907, %v903
        %v1112 = vpack.c.b16 %v908, %v904
        %v1113 = vpack.c.b16 %v909, %v905
        %v1114 = vpack.c.b16 %v910, %v906
        %v1115 = vpack.c.b16 %v915, %v911
        %v1116 = vpack.c.b16 %v916, %v912
        %v1117 = vpack.c.b16 %v917, %v913
        %v1118 = vpack.c.b16 %v918, %v914
        %v1119 = vpack.c.b16 %v923, %v919
        %v1120 = vpack.c.b16 %v924, %v920
        %v1121 = vpack.c.b16 %v925, %v921
        %v1122 = vpack.c.b16 %v926, %v922
        %v1123 = vpack.c.b16 %v931, %v927
        %v1124 = vpack.c.b16 %v932, %v928
        %v1125 = vpack.c.b16 %v933, %v929
        %v1126 = vpack.c.b16 %v934, %v930
        %v1127 = vpack.c.b16 %v939, %v935
        %v1128 = vpack.c.b16 %v940, %v936
        %v1129 = vpack.c.b16 %v941, %v937
        %v1130 = vpack.c.b16 %v942, %v938
        %v1131 = vpack.c.b16 %v947, %v943
        %v1132 = vpack.c.b16 %v948, %v944
        %v1133 = vpack.c.b16 %v949, %v945
        %v1134 = vpack.c.b16 %v950, %v946
        %v1135 = vpack.c.b16 %v955, %v951
        %v1136 = vpack.c.b16 %v956, %v952
        %v1137 = vpack.c.b16 %v957, %v953
        %v1138 = vpack.c.b16 %v958, %v954
        %v1139 = vpack.c.b16 %v963, %v959
        %v1140 = vpack.c.b16 %v964, %v960
        %v1141 = vpack.c.b16 %v965, %v961
        %v1142 = vpack.c.b16 %v966, %v962
        %v1143 = vpack.c.b16 %v971, %v967
        %v1144 = vpack.c.b16 %v972, %v968
        %v1145 = vpack.c.b16 %v973, %v969
        %v1146 = vpack.c.b16 %v974, %v970
        %v1147 = vpack.c.b16 %v979, %v975
        %v1148 = vpack.c.b16 %v980, %v976
        %v1149 = vpack.c.b16 %v981, %v977
        %v1150 = vpack.c.b16 %v982, %v978
        %v1151 = vpack.c.b16 %v987, %v983
        %v1152 = vpack.c.b16 %v988, %v984
        %v1153 = vpack.c.b16 %v989, %v985
        %v1154 = vpack.c.b16 %v990, %v986
        %v1155 = vpack.c.b16 %v995, %v991
        %v1156 = vpack.c.b16 %v996, %v992
        %v1157 = vpack.c.b16 %v997, %v993
        %v1158 = vpack.c.b16 %v998, %v994
        %v1159 = vpack.c.b16 %v1003, %v999
        %v1160 = vpack.c.b16 %v1004, %v1000
        %v1161 = vpack.c.b16 %v1005, %v1001
        %v1162 = vpack.c.b16 %v1006, %v1002
        %v1163 = vpack.c.b16 %v1011, %v1007
        %v1164 = vpack.c.b16 %v1012, %v1008
        %v1165 = vpack.c.b16 %v1013, %v1009
        %v1166 = vpack.c.b16 %v1014, %v1010
        %v1167 = vpack.c.b16 %v1019, %v1015
        %v1168 = vpack.c.b16 %v1020, %v1016
        %v1169 = vpack.c.b16 %v1021, %v1017
        %v1170 = vpack.c.b16 %v1022, %v1018
        %v1171 = vpack.c.b16 %v1027, %v1023
        %v1172 = vpack.c.b16 %v1028, %v1024
        %v1173 = vpack.c.b16 %v1029, %v1025
        %v1174 = vpack.c.b16 %v1030, %v1026
        %v1175 = vpack.c.b16 %v1035, %v1031
        %v1176 = vpack.c.b16 %v1036, %v1032
        %v1177 = vpack.c.b16 %v1037, %v1033
        %v1178 = vpack.c.b16 %v1038, %v1034
        %v1179 = vpack.c.b16 %v1043, %v1039
        %v1180 = vpack.c.b16 %v1044, %v1040
        %v1181 = vpack.c.b16 %v1045, %v1041
        %v1182 = vpack.c.b16 %v1046, %v1042
        %v1183 = vpack.c.b16 %v1051, %v1047
        %v1184 = vpack.c.b16 %v1052, %v1048
        %v1185 = vpack.c.b16 %v1053, %v1049
        %v1186 = vpack.c.b16 %v1054, %v1050
        %v1187 = vpack.c.b16 %v1059, %v1055
        %v1188 = vpack.c.b16 %v1060, %v1056
        %v1189 = vpack.c.b16 %v1061, %v1057
        %v1190 = vpack.c.b16 %v1062, %v1058
        %1319 = vmatprep.subr.bf16.mxu0 %v1064
        %1320 = vmatpush1.bf16.msra.mxu0 %v1063
        %1321 = vmatprep.subr.bf16.mxu0 %v1068
        %1322 = vmatpush1.bf16.msra.mxu0 %v1067
        %1323 = vmatprep.subr.bf16.mxu0 %v1072
        %1324 = vmatpush1.bf16.msra.mxu0 %v1071
        %1325 = vmatprep.subr.bf16.mxu0 %v1076
        %1326 = vmatpush1.bf16.msra.mxu0 %v1075
        %1327 = vmatprep.subr.bf16.mxu0 %v1080
        %1328 = vmatpush1.bf16.msra.mxu0 %v1079
        %1329 = vmatprep.subr.bf16.mxu0 %v1084
        %1330 = vmatpush1.bf16.msra.mxu0 %v1083
        %1331 = vmatprep.subr.bf16.mxu0 %v1088
        %1332 = vmatpush1.bf16.msra.mxu0 %v1087
        %1333 = vmatprep.subr.bf16.mxu0 %v1092
        %1334 = vmatpush1.bf16.msra.mxu0 %v1091
        %1335 = vmatprep.subr.bf16.mxu0 %v1096
        %1336 = vmatpush1.bf16.msra.mxu0 %v1095
        %1337 = vmatprep.subr.bf16.mxu0 %v1100
        %1338 = vmatpush1.bf16.msra.mxu0 %v1099
        %1339 = vmatprep.subr.bf16.mxu0 %v1104
        %1340 = vmatpush1.bf16.msra.mxu0 %v1103
        %1341 = vmatprep.subr.bf16.mxu0 %v1108
        %1342 = vmatpush1.bf16.msra.mxu0 %v1107
        %1343 = vmatprep.subr.bf16.mxu0 %v1112
        %1344 = vmatpush1.bf16.msra.mxu0 %v1111
        %1345 = vmatprep.subr.bf16.mxu0 %v1116
        %1346 = vmatpush1.bf16.msra.mxu0 %v1115
        %1347 = vmatprep.subr.bf16.mxu0 %v1120
        %1348 = vmatpush1.bf16.msra.mxu0 %v1119
        %1349 = vmatprep.subr.bf16.mxu0 %v1124
        %1350 = vmatpush1.bf16.msra.mxu0 %v1123
        %1351 = vmatprep.mubr.bf16.mxu0 %v664
        %1352 = vmatmul.mubr.bf16.gmra.mrb[0].mxu0 %v663
        %v1353 = vpop.f32.mrb[0].mxu0
        %v1354 = vadd.f32 %v628, %v1353
        %v1355 = vpop.f32.mrb[0].mxu0
        %v1356 = vadd.f32 %v632, %v1355
        %v1357 = vpop.f32.mrb[0].mxu0
        %v1358 = vadd.f32 %v628, %v1357
        %v1359 = vpop.f32.mrb[0].mxu0
        %v1360 = vadd.f32 %v632, %v1359
        %1361 = vmatprep.mubr.bf16.mxu0 %v668
        %1362 = vmatmul.mubr.bf16.gmra.mrb[0].mxu0 %v667
        %v1363 = vpop.f32.mrb[0].mxu0
        %v1364 = vadd.f32 %v628, %v1363
        %v1365 = vpop.f32.mrb[0].mxu0
        %v1366 = vadd.f32 %v632, %v1365
        %v1367 = vpop.f32.mrb[0].mxu0
        %v1368 = vpop.f32.mrb[0].mxu0
        %1369 = vdwg.mxu0
        %1370 = vmatprep.subr.bf16.mxu0 %v1128
        %1371 = vmatpush1.bf16.msra.mxu0 %v1127
        %1372 = vmatprep.subr.bf16.mxu0 %v1132
        %1373 = vmatpush1.bf16.msra.mxu0 %v1131
        %1374 = vmatprep.subr.bf16.mxu0 %v1136
        %1375 = vmatpush1.bf16.msra.mxu0 %v1135
        %1376 = vmatprep.subr.bf16.mxu0 %v1140
        %1377 = vmatpush1.bf16.msra.mxu0 %v1139
        %1378 = vmatprep.subr.bf16.mxu0 %v1144
        %1379 = vmatpush1.bf16.msra.mxu0 %v1143
        %1380 = vmatprep.subr.bf16.mxu0 %v1148
        %1381 = vmatpush1.bf16.msra.mxu0 %v1147
        %1382 = vmatprep.subr.bf16.mxu0 %v1152
        %1383 = vmatpush1.bf16.msra.mxu0 %v1151
        %1384 = vmatprep.subr.bf16.mxu0 %v1156
        %1385 = vmatpush1.bf16.msra.mxu0 %v1155
        %1386 = vmatprep.subr.bf16.mxu0 %v1160
        %1387 = vmatpush1.bf16.msra.mxu0 %v1159
        %1388 = vmatprep.subr.bf16.mxu0 %v1164
        %1389 = vmatpush1.bf16.msra.mxu0 %v1163
        %1390 = vmatprep.subr.bf16.mxu0 %v1168
        %1391 = vmatpush1.bf16.msra.mxu0 %v1167
        %1392 = vmatprep.subr.bf16.mxu0 %v1172
        %1393 = vmatpush1.bf16.msra.mxu0 %v1171
        %1394 = vmatprep.subr.bf16.mxu0 %v1176
        %1395 = vmatpush1.bf16.msra.mxu0 %v1175
        %1396 = vmatprep.subr.bf16.mxu0 %v1180
        %1397 = vmatpush1.bf16.msra.mxu0 %v1179
        %1398 = vmatprep.subr.bf16.mxu0 %v1184
        %1399 = vmatpush1.bf16.msra.mxu0 %v1183
        %1400 = vmatprep.subr.bf16.mxu0 %v1188
        %1401 = vmatpush1.bf16.msra.mxu0 %v1187
        %1402 = vmatprep.mubr.bf16.mxu0 %v666
        %1403 = vmatmul.mubr.bf16.gmra.mrb[0].mxu0 %v665
        %v1404 = vpop.f32.mrb[0].mxu0
        %v1405 = vadd.f32 %v1354, %v1404
        %v1406 = vpop.f32.mrb[0].mxu0
        %v1407 = vadd.f32 %v1356, %v1406
        %v1408 = vpop.f32.mrb[0].mxu0
        %v1409 = vadd.f32 %v1358, %v1408
        %v1410 = vpop.f32.mrb[0].mxu0
        %v1411 = vadd.f32 %v1360, %v1410
        %1412 = vmatprep.mubr.bf16.mxu0 %v670
        %1413 = vmatmul.mubr.bf16.gmra.mrb[0].mxu0 %v669
        %v1414 = vpop.f32.mrb[0].mxu0
        %v1415 = vadd.f32 %v1364, %v1414
        %v1416 = vpop.f32.mrb[0].mxu0
        %v1417 = vadd.f32 %v1366, %v1416
        %v1418 = vpop.f32.mrb[0].mxu0
        %v1419 = vpop.f32.mrb[0].mxu0
        %1420 = vdwg.mxu0
        %1421 = vmatprep.subr.bf16.mxu0 %v1066
        %1422 = vmatpush1.bf16.msra.mxu0 %v1065
        %1423 = vmatprep.subr.bf16.mxu0 %v1070
        %1424 = vmatpush1.bf16.msra.mxu0 %v1069
        %1425 = vmatprep.subr.bf16.mxu0 %v1074
        %1426 = vmatpush1.bf16.msra.mxu0 %v1073
        %1427 = vmatprep.subr.bf16.mxu0 %v1078
        %1428 = vmatpush1.bf16.msra.mxu0 %v1077
        %1429 = vmatprep.subr.bf16.mxu0 %v1082
        %1430 = vmatpush1.bf16.msra.mxu0 %v1081
        %1431 = vmatprep.subr.bf16.mxu0 %v1086
        %1432 = vmatpush1.bf16.msra.mxu0 %v1085
        %1433 = vmatprep.subr.bf16.mxu0 %v1090
        %1434 = vmatpush1.bf16.msra.mxu0 %v1089
        %1435 = vmatprep.subr.bf16.mxu0 %v1094
        %1436 = vmatpush1.bf16.msra.mxu0 %v1093
        %1437 = vmatprep.subr.bf16.mxu0 %v1098
        %1438 = vmatpush1.bf16.msra.mxu0 %v1097
        %1439 = vmatprep.subr.bf16.mxu0 %v1102
        %1440 = vmatpush1.bf16.msra.mxu0 %v1101
        %1441 = vmatprep.subr.bf16.mxu0 %v1106
        %1442 = vmatpush1.bf16.msra.mxu0 %v1105
        %1443 = vmatprep.subr.bf16.mxu0 %v1110
        %1444 = vmatpush1.bf16.msra.mxu0 %v1109
        %1445 = vmatprep.subr.bf16.mxu0 %v1114
        %1446 = vmatpush1.bf16.msra.mxu0 %v1113
        %1447 = vmatprep.subr.bf16.mxu0 %v1118
        %1448 = vmatpush1.bf16.msra.mxu0 %v1117
        %1449 = vmatprep.subr.bf16.mxu0 %v1122
        %1450 = vmatpush1.bf16.msra.mxu0 %v1121
        %1451 = vmatprep.subr.bf16.mxu0 %v1126
        %1452 = vmatpush1.bf16.msra.mxu0 %v1125
        %1453 = vmatprep.mubr.bf16.mxu0 %v664
        %1454 = vmatmul.mubr.bf16.gmra.mrb[0].mxu0 %v663
        %v1455 = vpop.f32.mrb[0].mxu0
        %v1456 = vadd.f32 %v636, %v1455
        %v1457 = vpop.f32.mrb[0].mxu0
        %v1458 = vadd.f32 %v640, %v1457
        %v1459 = vpop.f32.mrb[0].mxu0
        %v1460 = vadd.f32 %v636, %v1459
        %v1461 = vpop.f32.mrb[0].mxu0
        %v1462 = vadd.f32 %v640, %v1461
        %1463 = vmatprep.mubr.bf16.mxu0 %v668
        %1464 = vmatmul.mubr.bf16.gmra.mrb[0].mxu0 %v667
        %v1465 = vpop.f32.mrb[0].mxu0
        %v1466 = vadd.f32 %v636, %v1465
        %v1467 = vpop.f32.mrb[0].mxu0
        %v1468 = vadd.f32 %v640, %v1467
        %v1469 = vpop.f32.mrb[0].mxu0
        %v1470 = vpop.f32.mrb[0].mxu0
        %1471 = vdwg.mxu0
        %1472 = vmatprep.subr.bf16.mxu0 %v1130
        %1473 = vmatpush1.bf16.msra.mxu0 %v1129
        %1474 = vmatprep.subr.bf16.mxu0 %v1134
        %1475 = vmatpush1.bf16.msra.mxu0 %v1133
        %1476 = vmatprep.subr.bf16.mxu0 %v1138
        %1477 = vmatpush1.bf16.msra.mxu0 %v1137
        %1478 = vmatprep.subr.bf16.mxu0 %v1142
        %1479 = vmatpush1.bf16.msra.mxu0 %v1141
        %1480 = vmatprep.subr.bf16.mxu0 %v1146
        %1481 = vmatpush1.bf16.msra.mxu0 %v1145
        %1482 = vmatprep.subr.bf16.mxu0 %v1150
        %1483 = vmatpush1.bf16.msra.mxu0 %v1149
        %1484 = vmatprep.subr.bf16.mxu0 %v1154
        %1485 = vmatpush1.bf16.msra.mxu0 %v1153
        %1486 = vmatprep.subr.bf16.mxu0 %v1158
        %1487 = vmatpush1.bf16.msra.mxu0 %v1157
        %1488 = vmatprep.subr.bf16.mxu0 %v1162
        %1489 = vmatpush1.bf16.msra.mxu0 %v1161
        %1490 = vmatprep.subr.bf16.mxu0 %v1166
        %1491 = vmatpush1.bf16.msra.mxu0 %v1165
        %1492 = vmatprep.subr.bf16.mxu0 %v1170
        %1493 = vmatpush1.bf16.msra.mxu0 %v1169
        %1494 = vmatprep.subr.bf16.mxu0 %v1174
        %1495 = vmatpush1.bf16.msra.mxu0 %v1173
        %1496 = vmatprep.subr.bf16.mxu0 %v1178
        %1497 = vmatpush1.bf16.msra.mxu0 %v1177
        %1498 = vmatprep.subr.bf16.mxu0 %v1182
        %1499 = vmatpush1.bf16.msra.mxu0 %v1181
        %1500 = vmatprep.subr.bf16.mxu0 %v1186
        %1501 = vmatpush1.bf16.msra.mxu0 %v1185
        %1502 = vmatprep.subr.bf16.mxu0 %v1190
        %1503 = vmatpush1.bf16.msra.mxu0 %v1189
        %1504 = vmatprep.mubr.bf16.mxu0 %v666
        %1505 = vmatmul.mubr.bf16.gmra.mrb[0].mxu0 %v665
        %v1506 = vpop.f32.mrb[0].mxu0
        %v1507 = vadd.f32 %v1456, %v1506
        %v1508 = vpop.f32.mrb[0].mxu0
        %v1509 = vadd.f32 %v1458, %v1508
        %v1510 = vpop.f32.mrb[0].mxu0
        %v1511 = vadd.f32 %v1460, %v1510
        %v1512 = vpop.f32.mrb[0].mxu0
        %v1513 = vadd.f32 %v1462, %v1512
        %1514 = vmatprep.mubr.bf16.mxu0 %v670
        %1515 = vmatmul.mubr.bf16.gmra.mrb[0].mxu0 %v669
        %v1516 = vpop.f32.mrb[0].mxu0
        %v1517 = vadd.f32 %v1466, %v1516
        %v1518 = vpop.f32.mrb[0].mxu0
        %v1519 = vadd.f32 %v1468, %v1518
        %v1520 = vpop.f32.mrb[0].mxu0
        %v1521 = vpop.f32.mrb[0].mxu0
        %1522 = vdwg.mxu0
        %v1523 = vlaneseq
        %v1524 = vshrl.u32 %v1523, 7
        %v1525 = vadd.s32 %v1524, 8
        %v1526 = vadd.s32 %v1524, 16
        %vm1527 = vcmp.lt.s32.totalorder %v1524, 8
        %vm1528 = vcmp.lt.s32.totalorder %v1525, 8
        %vm1529 = vcmp.lt.s32.totalorder %v1526, 8
        %v1530 = vsel %vm1527, 0.044194173, 1.0
        %v1531 = vsel %vm1528, 0.044194173, 1.0
        %v1532 = vsel %vm1529, 0.044194173, 1.0
        %v1533 = vmul.f32 %v1405, %v1530
        %v1534 = vmul.f32 %v1407, %v1530
        %v1535 = vmul.f32 %v1507, %v1530
        %v1536 = vmul.f32 %v1509, %v1530
        %v1537 = vmul.f32 %v1409, %v1531
        %v1538 = vmul.f32 %v1411, %v1531
        %v1539 = vmul.f32 %v1511, %v1531
        %v1540 = vmul.f32 %v1513, %v1531
        %v1541 = vmul.f32 %v1415, %v1532
        %v1542 = vmul.f32 %v1417, %v1532
        %v1543 = vmul.f32 %v1517, %v1532
        %v1544 = vmul.f32 %v1519, %v1532
        %v1545 = vpack.c.bf16 %v1537, %v1533
        %v1546 = vpack.c.bf16 %v1538, %v1534
        %v1547 = vpack.c.bf16 %v1539, %v1535
        %v1548 = vpack.c.bf16 %v1540, %v1536
        %v1549 = vpack.c.bf16 %v1541, %v1541
        %v1550 = vpack.c.bf16 %v1542, %v1542
        %v1551 = vpack.c.bf16 %v1543, %v1543
        %v1552 = vpack.c.bf16 %v1544, %v1544
        %v1561 = vunpack.c.l.b16 %v1545
        %v1562 = vunpack.c.l.b16 %v1546
        %v1563 = vunpack.c.l.b16 %v1547
        %v1564 = vunpack.c.l.b16 %v1548
        %v1565 = vunpack.c.h.b16 %v1545
        %v1566 = vunpack.c.h.b16 %v1546
        %v1567 = vunpack.c.h.b16 %v1547
        %v1568 = vunpack.c.h.b16 %v1548
        %v1569 = vunpack.c.l.b16 %v1549
        %v1570 = vunpack.c.l.b16 %v1550
        %v1571 = vunpack.c.l.b16 %v1551
        %v1572 = vunpack.c.l.b16 %v1552
        %v1573 = vpack.c.b16 %v1562, %v1561
        %v1574 = vpack.c.b16 %v1564, %v1563
        %v1575 = vpack.c.b16 %v1566, %v1565
        %v1576 = vpack.c.b16 %v1568, %v1567
        %v1577 = vpack.c.b16 %v1570, %v1569
        %v1578 = vpack.c.b16 %v1572, %v1571
        %1585 = vst [vmem:[#allocation3] sm:$0xff] %v1573
        %1586 = vst [vmem:[#allocation3 + $0x8] sm:$0xff] %v1574
        %1587 = vst [vmem:[#allocation3 + $0x10] sm:$0xff] %v1575
        %1588 = vst [vmem:[#allocation3 + $0x18] sm:$0xff] %v1576
        %1589 = vst [vmem:[#allocation3 + $0x20] sm:$0xff] %v1577
        %1590 = vst [vmem:[#allocation3 + $0x28] sm:$0xff] %v1578
        %v1591 = vld [vmem:[#allocation3] sm:$0xff]
        %v1592 = vld [vmem:[#allocation3 + $0x8] sm:$0xff]
        %v1593 = vld [vmem:[#allocation3 + $0x10] sm:$0xff]
        %v1594 = vld [vmem:[#allocation3 + $0x18] sm:$0xff]
        %v1595 = vld [vmem:[#allocation3 + $0x20] sm:$0xff]
        %v1596 = vld [vmem:[#allocation3 + $0x28] sm:$0xff]
        %v1599 = vunpack.c.l.b16 %v1591
        %v1600 = vunpack.c.h.b16 %v1591
        %v1601 = vunpack.c.l.b16 %v1592
        %v1602 = vunpack.c.h.b16 %v1592
        %v1603 = vpack.c.b16 %v1599, %v1599
        %v1604 = vpack.c.b16 %v1600, %v1600
        %v1605 = vpack.c.b16 %v1601, %v1601
        %v1606 = vpack.c.b16 %v1602, %v1602
        %v1613 = vunpack.c.l.b16 %v1593
        %v1614 = vunpack.c.h.b16 %v1593
        %v1615 = vunpack.c.l.b16 %v1594
        %v1616 = vunpack.c.h.b16 %v1594
        %v1617 = vpack.c.b16 %v1613, %v1613
        %v1618 = vpack.c.b16 %v1614, %v1614
        %v1619 = vpack.c.b16 %v1615, %v1615
        %v1620 = vpack.c.b16 %v1616, %v1616
        %1625 = vmatprep.subr.bf16.mxu0 %v1618
        %1626 = vmatpush1.bf16.xpose.msra.mxu0 %v1617
        %1627 = vmatprep.subr.bf16.mxu0 0
        %1628 = vmatpush1.bf16.xpose.msra.mxu0 0
        %1629 = vmatprep.subr.bf16.mxu0 0
        %1630 = vmatpush1.bf16.xpose.msra.mxu0 0
        %1631 = vmatprep.subr.bf16.mxu0 0
        %1632 = vmatpush1.bf16.xpose.msra.mxu0 0
        %1633 = vmatprep.subr.bf16.mxu0 0
        %1634 = vmatpush1.bf16.xpose.msra.mxu0 0
        %1635 = vmatprep.subr.bf16.mxu0 0
        %1636 = vmatpush1.bf16.xpose.msra.mxu0 0
        %1637 = vmatprep.subr.bf16.mxu0 0
        %1638 = vmatpush1.bf16.xpose.msra.mxu0 0
        %1639 = vmatprep.subr.bf16.mxu0 0
        %1640 = vmatpush1.bf16.xpose.msra.mxu0 0
        %1641 = vmatprep.subr.bf16.mxu0 0
        %1642 = vmatpush1.bf16.xpose.msra.mxu0 0
        %1643 = vmatprep.subr.bf16.mxu0 0
        %1644 = vmatpush1.bf16.xpose.msra.mxu0 0
        %1645 = vmatprep.subr.bf16.mxu0 0
        %1646 = vmatpush1.bf16.xpose.msra.mxu0 0
        %1647 = vmatprep.subr.bf16.mxu0 0
        %1648 = vmatpush1.bf16.xpose.msra.mxu0 0
        %1649 = vmatprep.subr.bf16.mxu0 0
        %1650 = vmatpush1.bf16.xpose.msra.mxu0 0
        %1651 = vmatprep.subr.bf16.mxu0 0
        %1652 = vmatpush1.bf16.xpose.msra.mxu0 0
        %1653 = vmatprep.subr.bf16.mxu0 0
        %1654 = vmatpush1.bf16.xpose.msra.mxu0 0
        %1655 = vmatprep.subr.bf16.mxu0 0
        %1656 = vmatpush1.bf16.xpose.msra.mxu0 0
        %1657 = vmatprep.mubr.bf16.mxu0 %v1604
        %1658 = vmatmul.mubr.bf16.gmra.mrb[0].mxu0 %v1603
        %v1659 = vpop.f32.mrb[0].mxu0
        %v1660 = vadd.f32 0.0, %v1659
        %v1661 = vpop.f32.mrb[0].mxu0
        %v1662 = vpop.f32.mrb[0].mxu0
        %v1663 = vpop.f32.mrb[0].mxu0
        %1664 = vdwg.mxu0
        %1665 = vmatprep.subr.bf16.mxu0 %v1620
        %1666 = vmatpush1.bf16.xpose.msra.mxu0 %v1619
        %1667 = vmatprep.subr.bf16.mxu0 0
        %1668 = vmatpush1.bf16.xpose.msra.mxu0 0
        %1669 = vmatprep.subr.bf16.mxu0 0
        %1670 = vmatpush1.bf16.xpose.msra.mxu0 0
        %1671 = vmatprep.subr.bf16.mxu0 0
        %1672 = vmatpush1.bf16.xpose.msra.mxu0 0
        %1673 = vmatprep.subr.bf16.mxu0 0
        %1674 = vmatpush1.bf16.xpose.msra.mxu0 0
        %1675 = vmatprep.subr.bf16.mxu0 0
        %1676 = vmatpush1.bf16.xpose.msra.mxu0 0
        %1677 = vmatprep.subr.bf16.mxu0 0
        %1678 = vmatpush1.bf16.xpose.msra.mxu0 0
        %1679 = vmatprep.subr.bf16.mxu0 0
        %1680 = vmatpush1.bf16.xpose.msra.mxu0 0
        %1681 = vmatprep.subr.bf16.mxu0 0
        %1682 = vmatpush1.bf16.xpose.msra.mxu0 0
        %1683 = vmatprep.subr.bf16.mxu0 0
        %1684 = vmatpush1.bf16.xpose.msra.mxu0 0
        %1685 = vmatprep.subr.bf16.mxu0 0
        %1686 = vmatpush1.bf16.xpose.msra.mxu0 0
        %1687 = vmatprep.subr.bf16.mxu0 0
        %1688 = vmatpush1.bf16.xpose.msra.mxu0 0
        %1689 = vmatprep.subr.bf16.mxu0 0
        %1690 = vmatpush1.bf16.xpose.msra.mxu0 0
        %1691 = vmatprep.subr.bf16.mxu0 0
        %1692 = vmatpush1.bf16.xpose.msra.mxu0 0
        %1693 = vmatprep.subr.bf16.mxu0 0
        %1694 = vmatpush1.bf16.xpose.msra.mxu0 0
        %1695 = vmatprep.subr.bf16.mxu0 0
        %1696 = vmatpush1.bf16.xpose.msra.mxu0 0
        %1697 = vmatprep.mubr.bf16.mxu0 %v1606
        %1698 = vmatmul.mubr.bf16.gmra.mrb[0].mxu0 %v1605
        %v1699 = vpop.f32.mrb[0].mxu0
        %v1700 = vadd.f32 %v1660, %v1699
        %v1701 = vpop.f32.mrb[0].mxu0
        %v1702 = vpop.f32.mrb[0].mxu0
        %v1703 = vpop.f32.mrb[0].mxu0
        %1704 = vdwg.mxu0
        %vm1705 = vcmask 64512
        %v1706 = vsel %vm1705, %v1700, -inf
        %1707 = vmax.xlane.f32.xlu0 %v1706
        %v1708 = vpop.xlane.xlu0 %1707
        %v1709 = vsub.f32 %v1700, %v1708
        %v1710 = vmul.f32 %v1709, 1.442695
        %v1711 = vpow.pop %v1710
        %v1712 = vsel %vm1705, %v1711, 0.0
        %1713 = vadd.xlane.f32.xlu0 %v1712
        %v1714 = vpop.xlane.xlu0 %1713
        %v1715 = vrcp.pop %v1714
        %v1716 = vmul.f32 %v1711, %v1715
        %v1717 = vpack.c.bf16 %v1716, %v1716
        %v1720 = vunpack.c.l.b16 %v1595
        %v1721 = vunpack.c.h.b16 %v1595
        %v1722 = vunpack.c.l.b16 %v1596
        %v1723 = vunpack.c.h.b16 %v1596
        %v1724 = vpack.c.b16 %v1720, %v1720
        %v1725 = vpack.c.b16 %v1721, %v1721
        %v1726 = vpack.c.b16 %v1722, %v1722
        %v1727 = vpack.c.b16 %v1723, %v1723
        %v1729 = vsel %vm1705, %v1717, 0
        %vm1731 = vcmask 1043456
        %v1733 = vsel %vm1731, %v1724, 0
        %v1736 = vsel %vm1731, %v1725, 0
        %v1739 = vsel %vm1731, %v1726, 0
        %v1742 = vsel %vm1731, %v1727, 0
        %1744 = vmatprep.subr.bf16.mxu0 %v1736
        %1745 = vmatpush1.bf16.msra.mxu0 %v1733
        %1746 = vmatprep.subr.bf16.mxu0 0
        %1747 = vmatpush1.bf16.msra.mxu0 0
        %1748 = vmatprep.subr.bf16.mxu0 0
        %1749 = vmatpush1.bf16.msra.mxu0 0
        %1750 = vmatprep.subr.bf16.mxu0 0
        %1751 = vmatpush1.bf16.msra.mxu0 0
        %1752 = vmatprep.subr.bf16.mxu0 0
        %1753 = vmatpush1.bf16.msra.mxu0 0
        %1754 = vmatprep.subr.bf16.mxu0 0
        %1755 = vmatpush1.bf16.msra.mxu0 0
        %1756 = vmatprep.subr.bf16.mxu0 0
        %1757 = vmatpush1.bf16.msra.mxu0 0
        %1758 = vmatprep.subr.bf16.mxu0 0
        %1759 = vmatpush1.bf16.msra.mxu0 0
        %1760 = vmatprep.subr.bf16.mxu0 0
        %1761 = vmatpush1.bf16.msra.mxu0 0
        %1762 = vmatprep.subr.bf16.mxu0 0
        %1763 = vmatpush1.bf16.msra.mxu0 0
        %1764 = vmatprep.subr.bf16.mxu0 0
        %1765 = vmatpush1.bf16.msra.mxu0 0
        %1766 = vmatprep.subr.bf16.mxu0 0
        %1767 = vmatpush1.bf16.msra.mxu0 0
        %1768 = vmatprep.subr.bf16.mxu0 0
        %1769 = vmatpush1.bf16.msra.mxu0 0
        %1770 = vmatprep.subr.bf16.mxu0 0
        %1771 = vmatpush1.bf16.msra.mxu0 0
        %1772 = vmatprep.subr.bf16.mxu0 0
        %1773 = vmatpush1.bf16.msra.mxu0 0
        %1774 = vmatprep.subr.bf16.mxu0 0
        %1775 = vmatpush1.bf16.msra.mxu0 0
        %1776 = vmatprep.mubr.bf16.mxu0 0
        %1777 = vmatmul.mubr.bf16.gmra.mrb[0].mxu0 %v1729
        %v1778 = vpop.f32.mrb[0].mxu0
        %v1779 = vadd.f32 0.0, %v1778
        %v1780 = vpop.f32.mrb[0].mxu0
        %v1781 = vadd.f32 0.0, %v1780
        %v1782 = vpop.f32.mrb[0].mxu0
        %v1783 = vpop.f32.mrb[0].mxu0
        %1784 = vdwg.mxu0
        %1785 = vmatprep.subr.bf16.mxu0 %v1742
        %1786 = vmatpush1.bf16.msra.mxu0 %v1739
        %1787 = vmatprep.subr.bf16.mxu0 0
        %1788 = vmatpush1.bf16.msra.mxu0 0
        %1789 = vmatprep.subr.bf16.mxu0 0
        %1790 = vmatpush1.bf16.msra.mxu0 0
        %1791 = vmatprep.subr.bf16.mxu0 0
        %1792 = vmatpush1.bf16.msra.mxu0 0
        %1793 = vmatprep.subr.bf16.mxu0 0
        %1794 = vmatpush1.bf16.msra.mxu0 0
        %1795 = vmatprep.subr.bf16.mxu0 0
        %1796 = vmatpush1.bf16.msra.mxu0 0
        %1797 = vmatprep.subr.bf16.mxu0 0
        %1798 = vmatpush1.bf16.msra.mxu0 0
        %1799 = vmatprep.subr.bf16.mxu0 0
        %1800 = vmatpush1.bf16.msra.mxu0 0
        %1801 = vmatprep.subr.bf16.mxu0 0
        %1802 = vmatpush1.bf16.msra.mxu0 0
        %1803 = vmatprep.subr.bf16.mxu0 0
        %1804 = vmatpush1.bf16.msra.mxu0 0
        %1805 = vmatprep.subr.bf16.mxu0 0
        %1806 = vmatpush1.bf16.msra.mxu0 0
        %1807 = vmatprep.subr.bf16.mxu0 0
        %1808 = vmatpush1.bf16.msra.mxu0 0
        %1809 = vmatprep.subr.bf16.mxu0 0
        %1810 = vmatpush1.bf16.msra.mxu0 0
        %1811 = vmatprep.subr.bf16.mxu0 0
        %1812 = vmatpush1.bf16.msra.mxu0 0
        %1813 = vmatprep.subr.bf16.mxu0 0
        %1814 = vmatpush1.bf16.msra.mxu0 0
        %1815 = vmatprep.subr.bf16.mxu0 0
        %1816 = vmatpush1.bf16.msra.mxu0 0
        %1817 = vmatprep.mubr.bf16.mxu0 0
        %1818 = vmatmul.mubr.bf16.gmra.mrb[0].mxu0 %v1729
        %v1819 = vpop.f32.mrb[0].mxu0
        %v1820 = vadd.f32 0.0, %v1819
        %v1821 = vpop.f32.mrb[0].mxu0
        %v1822 = vadd.f32 0.0, %v1821
        %v1823 = vpop.f32.mrb[0].mxu0
        %v1824 = vpop.f32.mrb[0].mxu0
        %1825 = vdwg.mxu0
        %v1826 = vpack.c.bf16 %v1779, %v1779
        %v1827 = vpack.c.bf16 %v1781, %v1781
        %v1828 = vpack.c.bf16 %v1820, %v1820
        %v1829 = vpack.c.bf16 %v1822, %v1822
        %v1834 = vunpack.c.l.b16 %v1826
        %v1835 = vunpack.c.l.b16 %v1827
        %v1836 = vunpack.c.l.b16 %v1828
        %v1837 = vunpack.c.l.b16 %v1829
        %v1838 = vpack.c.b16 %v1835, %v1834
        %v1839 = vpack.c.b16 %v1837, %v1836
        %1842 = vst [vmem:[#allocation4] sm:$0xff] %v1838
        %1843 = vst [vmem:[#allocation4 + $0x8] sm:$0xff] %v1839
        %v1844 = vld [vmem:[#allocation4] sm:$0xff]
        %v1845 = vld [vmem:[#allocation4 + $0x8] sm:$0xff]
        %v1846 = vld [vmem:[#allocation14] sm:$0xff]
        %v1847 = vld [vmem:[#allocation14 + $0x8] sm:$0xff]
        %v1848 = vld [vmem:[#allocation14 + $0x10] sm:$0xff]
        %v1849 = vld [vmem:[#allocation14 + $0x18] sm:$0xff]
        %v1850 = vld [vmem:[#allocation14 + $0x20] sm:$0xff]
        %v1851 = vld [vmem:[#allocation14 + $0x28] sm:$0xff]
        %v1852 = vld [vmem:[#allocation14 + $0x30] sm:$0xff]
        %v1853 = vld [vmem:[#allocation14 + $0x38] sm:$0xff]
        %v1854 = vld [vmem:[#allocation14 + $0x40] sm:$0xff]
        %v1855 = vld [vmem:[#allocation14 + $0x48] sm:$0xff]
        %v1856 = vld [vmem:[#allocation14 + $0x50] sm:$0xff]
        %v1857 = vld [vmem:[#allocation14 + $0x58] sm:$0xff]
        %v1858 = vld [vmem:[#allocation14 + $0x60] sm:$0xff]
        %v1859 = vld [vmem:[#allocation14 + $0x68] sm:$0xff]
        %v1860 = vld [vmem:[#allocation14 + $0x70] sm:$0xff]
        %v1861 = vld [vmem:[#allocation14 + $0x78] sm:$0xff]
        %v1862 = vld [vmem:[#allocation14 + $0x80] sm:$0xff]
        %v1863 = vld [vmem:[#allocation14 + $0x88] sm:$0xff]
        %v1864 = vld [vmem:[#allocation14 + $0x90] sm:$0xff]
        %v1865 = vld [vmem:[#allocation14 + $0x98] sm:$0xff]
        %v1866 = vld [vmem:[#allocation14 + $0xa0] sm:$0xff]
        %v1867 = vld [vmem:[#allocation14 + $0xa8] sm:$0xff]
        %v1868 = vld [vmem:[#allocation14 + $0xb0] sm:$0xff]
        %v1869 = vld [vmem:[#allocation14 + $0xb8] sm:$0xff]
        %v1870 = vld [vmem:[#allocation14 + $0xc0] sm:$0xff]
        %v1871 = vld [vmem:[#allocation14 + $0xc8] sm:$0xff]
        %v1872 = vld [vmem:[#allocation14 + $0xd0] sm:$0xff]
        %v1873 = vld [vmem:[#allocation14 + $0xd8] sm:$0xff]
        %v1874 = vld [vmem:[#allocation14 + $0xe0] sm:$0xff]
        %v1875 = vld [vmem:[#allocation14 + $0xe8] sm:$0xff]
        %v1876 = vld [vmem:[#allocation14 + $0xf0] sm:$0xff]
        %v1877 = vld [vmem:[#allocation14 + $0xf8] sm:$0xff]
        %v1878 = vld [vmem:[#allocation14 + $0x100] sm:$0xff]
        %v1879 = vld [vmem:[#allocation14 + $0x108] sm:$0xff]
        %v1880 = vld [vmem:[#allocation14 + $0x110] sm:$0xff]
        %v1881 = vld [vmem:[#allocation14 + $0x118] sm:$0xff]
        %v1882 = vld [vmem:[#allocation14 + $0x120] sm:$0xff]
        %v1883 = vld [vmem:[#allocation14 + $0x128] sm:$0xff]
        %v1884 = vld [vmem:[#allocation14 + $0x130] sm:$0xff]
        %v1885 = vld [vmem:[#allocation14 + $0x138] sm:$0xff]
        %v1886 = vld [vmem:[#allocation14 + $0x140] sm:$0xff]
        %v1887 = vld [vmem:[#allocation14 + $0x148] sm:$0xff]
        %v1888 = vld [vmem:[#allocation14 + $0x150] sm:$0xff]
        %v1889 = vld [vmem:[#allocation14 + $0x158] sm:$0xff]
        %v1890 = vld [vmem:[#allocation14 + $0x160] sm:$0xff]
        %v1891 = vld [vmem:[#allocation14 + $0x168] sm:$0xff]
        %v1892 = vld [vmem:[#allocation14 + $0x170] sm:$0xff]
        %v1893 = vld [vmem:[#allocation14 + $0x178] sm:$0xff]
        %v1894 = vld [vmem:[#allocation14 + $0x180] sm:$0xff]
        %v1895 = vld [vmem:[#allocation14 + $0x188] sm:$0xff]
        %v1896 = vld [vmem:[#allocation14 + $0x190] sm:$0xff]
        %v1897 = vld [vmem:[#allocation14 + $0x198] sm:$0xff]
        %v1898 = vld [vmem:[#allocation14 + $0x1a0] sm:$0xff]
        %v1899 = vld [vmem:[#allocation14 + $0x1a8] sm:$0xff]
        %v1900 = vld [vmem:[#allocation14 + $0x1b0] sm:$0xff]
        %v1901 = vld [vmem:[#allocation14 + $0x1b8] sm:$0xff]
        %v1902 = vld [vmem:[#allocation14 + $0x1c0] sm:$0xff]
        %v1903 = vld [vmem:[#allocation14 + $0x1c8] sm:$0xff]
        %v1904 = vld [vmem:[#allocation14 + $0x1d0] sm:$0xff]
        %v1905 = vld [vmem:[#allocation14 + $0x1d8] sm:$0xff]
        %v1906 = vld [vmem:[#allocation14 + $0x1e0] sm:$0xff]
        %v1907 = vld [vmem:[#allocation14 + $0x1e8] sm:$0xff]
        %v1908 = vld [vmem:[#allocation14 + $0x1f0] sm:$0xff]
        %v1909 = vld [vmem:[#allocation14 + $0x1f8] sm:$0xff]
        %v1910 = vld [vmem:[#allocation14 + $0x200] sm:$0xff]
        %v1911 = vld [vmem:[#allocation14 + $0x208] sm:$0xff]
        %v1912 = vld [vmem:[#allocation14 + $0x210] sm:$0xff]
        %v1913 = vld [vmem:[#allocation14 + $0x218] sm:$0xff]
        %v1914 = vld [vmem:[#allocation14 + $0x220] sm:$0xff]
        %v1915 = vld [vmem:[#allocation14 + $0x228] sm:$0xff]
        %v1916 = vld [vmem:[#allocation14 + $0x230] sm:$0xff]
        %v1917 = vld [vmem:[#allocation14 + $0x238] sm:$0xff]
        %v1918 = vld [vmem:[#allocation14 + $0x240] sm:$0xff]
        %v1919 = vld [vmem:[#allocation14 + $0x248] sm:$0xff]
        %v1920 = vld [vmem:[#allocation14 + $0x250] sm:$0xff]
        %v1921 = vld [vmem:[#allocation14 + $0x258] sm:$0xff]
        %v1922 = vld [vmem:[#allocation14 + $0x260] sm:$0xff]
        %v1923 = vld [vmem:[#allocation14 + $0x268] sm:$0xff]
        %v1924 = vld [vmem:[#allocation14 + $0x270] sm:$0xff]
        %v1925 = vld [vmem:[#allocation14 + $0x278] sm:$0xff]
        %v1926 = vld [vmem:[#allocation14 + $0x280] sm:$0xff]
        %v1927 = vld [vmem:[#allocation14 + $0x288] sm:$0xff]
        %v1928 = vld [vmem:[#allocation14 + $0x290] sm:$0xff]
        %v1929 = vld [vmem:[#allocation14 + $0x298] sm:$0xff]
        %v1930 = vld [vmem:[#allocation14 + $0x2a0] sm:$0xff]
        %v1931 = vld [vmem:[#allocation14 + $0x2a8] sm:$0xff]
        %v1932 = vld [vmem:[#allocation14 + $0x2b0] sm:$0xff]
        %v1933 = vld [vmem:[#allocation14 + $0x2b8] sm:$0xff]
        %v1934 = vld [vmem:[#allocation14 + $0x2c0] sm:$0xff]
        %v1935 = vld [vmem:[#allocation14 + $0x2c8] sm:$0xff]
        %v1936 = vld [vmem:[#allocation14 + $0x2d0] sm:$0xff]
        %v1937 = vld [vmem:[#allocation14 + $0x2d8] sm:$0xff]
        %v1938 = vld [vmem:[#allocation14 + $0x2e0] sm:$0xff]
        %v1939 = vld [vmem:[#allocation14 + $0x2e8] sm:$0xff]
        %v1940 = vld [vmem:[#allocation14 + $0x2f0] sm:$0xff]
        %v1941 = vld [vmem:[#allocation14 + $0x2f8] sm:$0xff]
        %v1942 = vld [vmem:[#allocation14 + $0x300] sm:$0xff]
        %v1943 = vld [vmem:[#allocation14 + $0x308] sm:$0xff]
        %v1944 = vld [vmem:[#allocation14 + $0x310] sm:$0xff]
        %v1945 = vld [vmem:[#allocation14 + $0x318] sm:$0xff]
        %v1946 = vld [vmem:[#allocation14 + $0x320] sm:$0xff]
        %v1947 = vld [vmem:[#allocation14 + $0x328] sm:$0xff]
        %v1948 = vld [vmem:[#allocation14 + $0x330] sm:$0xff]
        %v1949 = vld [vmem:[#allocation14 + $0x338] sm:$0xff]
        %v1950 = vld [vmem:[#allocation14 + $0x340] sm:$0xff]
        %v1951 = vld [vmem:[#allocation14 + $0x348] sm:$0xff]
        %v1952 = vld [vmem:[#allocation14 + $0x350] sm:$0xff]
        %v1953 = vld [vmem:[#allocation14 + $0x358] sm:$0xff]
        %v1954 = vld [vmem:[#allocation14 + $0x360] sm:$0xff]
        %v1955 = vld [vmem:[#allocation14 + $0x368] sm:$0xff]
        %v1956 = vld [vmem:[#allocation14 + $0x370] sm:$0xff]
        %v1957 = vld [vmem:[#allocation14 + $0x378] sm:$0xff]
        %v1958 = vld [vmem:[#allocation14 + $0x380] sm:$0xff]
        %v1959 = vld [vmem:[#allocation14 + $0x388] sm:$0xff]
        %v1960 = vld [vmem:[#allocation14 + $0x390] sm:$0xff]
        %v1961 = vld [vmem:[#allocation14 + $0x398] sm:$0xff]
        %v1962 = vld [vmem:[#allocation14 + $0x3a0] sm:$0xff]
        %v1963 = vld [vmem:[#allocation14 + $0x3a8] sm:$0xff]
        %v1964 = vld [vmem:[#allocation14 + $0x3b0] sm:$0xff]
        %v1965 = vld [vmem:[#allocation14 + $0x3b8] sm:$0xff]
        %v1966 = vld [vmem:[#allocation14 + $0x3c0] sm:$0xff]
        %v1967 = vld [vmem:[#allocation14 + $0x3c8] sm:$0xff]
        %v1968 = vld [vmem:[#allocation14 + $0x3d0] sm:$0xff]
        %v1969 = vld [vmem:[#allocation14 + $0x3d8] sm:$0xff]
        %v1970 = vld [vmem:[#allocation14 + $0x3e0] sm:$0xff]
        %v1971 = vld [vmem:[#allocation14 + $0x3e8] sm:$0xff]
        %v1972 = vld [vmem:[#allocation14 + $0x3f0] sm:$0xff]
        %v1973 = vld [vmem:[#allocation14 + $0x3f8] sm:$0xff]
        %v1974 = vld [vmem:[#allocation16] sm:$0xf]
        %v1976 = vlaneseq
        %v1977 = vshrl.u32 %v1976, 7
        %v1978 = vsub.s32 0, %v1977
        %v1979 = vrot.slane %v1974, %v1978
        %v1980 = vlaneseq
        %v1981 = vshrl.u32 %v1980, 7
        %v1982 = vsub.s32 1, %v1981
        %v1983 = vrot.slane %v1974, %v1982
        %v1984 = vlaneseq
        %v1985 = vshrl.u32 %v1984, 7
        %v1986 = vsub.s32 2, %v1985
        %v1987 = vrot.slane %v1974, %v1986
        %v1988 = vlaneseq
        %v1989 = vshrl.u32 %v1988, 7
        %v1990 = vsub.s32 3, %v1989
        %v1991 = vrot.slane %v1974, %v1990
        %v1998 = vunpack.c.l.b16 %v1844
        %v1999 = vunpack.c.h.b16 %v1844
        %v2000 = vunpack.c.l.b16 %v1845
        %v2001 = vunpack.c.h.b16 %v1845
        %v2002 = vpack.c.b16 %v1998, %v1998
        %v2003 = vpack.c.b16 %v1999, %v1999
        %v2004 = vpack.c.b16 %v2000, %v2000
        %v2005 = vpack.c.b16 %v2001, %v2001
        %v2138 = vunpack.c.l.b16 %v1846
        %v2139 = vunpack.c.h.b16 %v1846
        %v2140 = vunpack.c.l.b16 %v1847
        %v2141 = vunpack.c.h.b16 %v1847
        %v2142 = vunpack.c.l.b16 %v1848
        %v2143 = vunpack.c.h.b16 %v1848
        %v2144 = vunpack.c.l.b16 %v1849
        %v2145 = vunpack.c.h.b16 %v1849
        %v2146 = vunpack.c.l.b16 %v1850
        %v2147 = vunpack.c.h.b16 %v1850
        %v2148 = vunpack.c.l.b16 %v1851
        %v2149 = vunpack.c.h.b16 %v1851
        %v2150 = vunpack.c.l.b16 %v1852
        %v2151 = vunpack.c.h.b16 %v1852
        %v2152 = vunpack.c.l.b16 %v1853
        %v2153 = vunpack.c.h.b16 %v1853
        %v2154 = vunpack.c.l.b16 %v1854
        %v2155 = vunpack.c.h.b16 %v1854
        %v2156 = vunpack.c.l.b16 %v1855
        %v2157 = vunpack.c.h.b16 %v1855
        %v2158 = vunpack.c.l.b16 %v1856
        %v2159 = vunpack.c.h.b16 %v1856
        %v2160 = vunpack.c.l.b16 %v1857
        %v2161 = vunpack.c.h.b16 %v1857
        %v2162 = vunpack.c.l.b16 %v1858
        %v2163 = vunpack.c.h.b16 %v1858
        %v2164 = vunpack.c.l.b16 %v1859
        %v2165 = vunpack.c.h.b16 %v1859
        %v2166 = vunpack.c.l.b16 %v1860
        %v2167 = vunpack.c.h.b16 %v1860
        %v2168 = vunpack.c.l.b16 %v1861
        %v2169 = vunpack.c.h.b16 %v1861
        %v2170 = vunpack.c.l.b16 %v1862
        %v2171 = vunpack.c.h.b16 %v1862
        %v2172 = vunpack.c.l.b16 %v1863
        %v2173 = vunpack.c.h.b16 %v1863
        %v2174 = vunpack.c.l.b16 %v1864
        %v2175 = vunpack.c.h.b16 %v1864
        %v2176 = vunpack.c.l.b16 %v1865
        %v2177 = vunpack.c.h.b16 %v1865
        %v2178 = vunpack.c.l.b16 %v1866
        %v2179 = vunpack.c.h.b16 %v1866
        %v2180 = vunpack.c.l.b16 %v1867
        %v2181 = vunpack.c.h.b16 %v1867
        %v2182 = vunpack.c.l.b16 %v1868
        %v2183 = vunpack.c.h.b16 %v1868
        %v2184 = vunpack.c.l.b16 %v1869
        %v2185 = vunpack.c.h.b16 %v1869
        %v2186 = vunpack.c.l.b16 %v1870
        %v2187 = vunpack.c.h.b16 %v1870
        %v2188 = vunpack.c.l.b16 %v1871
        %v2189 = vunpack.c.h.b16 %v1871
        %v2190 = vunpack.c.l.b16 %v1872
        %v2191 = vunpack.c.h.b16 %v1872
        %v2192 = vunpack.c.l.b16 %v1873
        %v2193 = vunpack.c.h.b16 %v1873
        %v2194 = vunpack.c.l.b16 %v1874
        %v2195 = vunpack.c.h.b16 %v1874
        %v2196 = vunpack.c.l.b16 %v1875
        %v2197 = vunpack.c.h.b16 %v1875
        %v2198 = vunpack.c.l.b16 %v1876
        %v2199 = vunpack.c.h.b16 %v1876
        %v2200 = vunpack.c.l.b16 %v1877
        %v2201 = vunpack.c.h.b16 %v1877
        %v2202 = vunpack.c.l.b16 %v1878
        %v2203 = vunpack.c.h.b16 %v1878
        %v2204 = vunpack.c.l.b16 %v1879
        %v2205 = vunpack.c.h.b16 %v1879
        %v2206 = vunpack.c.l.b16 %v1880
        %v2207 = vunpack.c.h.b16 %v1880
        %v2208 = vunpack.c.l.b16 %v1881
        %v2209 = vunpack.c.h.b16 %v1881
        %v2210 = vunpack.c.l.b16 %v1882
        %v2211 = vunpack.c.h.b16 %v1882
        %v2212 = vunpack.c.l.b16 %v1883
        %v2213 = vunpack.c.h.b16 %v1883
        %v2214 = vunpack.c.l.b16 %v1884
        %v2215 = vunpack.c.h.b16 %v1884
        %v2216 = vunpack.c.l.b16 %v1885
        %v2217 = vunpack.c.h.b16 %v1885
        %v2218 = vunpack.c.l.b16 %v1886
        %v2219 = vunpack.c.h.b16 %v1886
        %v2220 = vunpack.c.l.b16 %v1887
        %v2221 = vunpack.c.h.b16 %v1887
        %v2222 = vunpack.c.l.b16 %v1888
        %v2223 = vunpack.c.h.b16 %v1888
        %v2224 = vunpack.c.l.b16 %v1889
        %v2225 = vunpack.c.h.b16 %v1889
        %v2226 = vunpack.c.l.b16 %v1890
        %v2227 = vunpack.c.h.b16 %v1890
        %v2228 = vunpack.c.l.b16 %v1891
        %v2229 = vunpack.c.h.b16 %v1891
        %v2230 = vunpack.c.l.b16 %v1892
        %v2231 = vunpack.c.h.b16 %v1892
        %v2232 = vunpack.c.l.b16 %v1893
        %v2233 = vunpack.c.h.b16 %v1893
        %v2234 = vunpack.c.l.b16 %v1894
        %v2235 = vunpack.c.h.b16 %v1894
        %v2236 = vunpack.c.l.b16 %v1895
        %v2237 = vunpack.c.h.b16 %v1895
        %v2238 = vunpack.c.l.b16 %v1896
        %v2239 = vunpack.c.h.b16 %v1896
        %v2240 = vunpack.c.l.b16 %v1897
        %v2241 = vunpack.c.h.b16 %v1897
        %v2242 = vunpack.c.l.b16 %v1898
        %v2243 = vunpack.c.h.b16 %v1898
        %v2244 = vunpack.c.l.b16 %v1899
        %v2245 = vunpack.c.h.b16 %v1899
        %v2246 = vunpack.c.l.b16 %v1900
        %v2247 = vunpack.c.h.b16 %v1900
        %v2248 = vunpack.c.l.b16 %v1901
        %v2249 = vunpack.c.h.b16 %v1901
        %v2250 = vunpack.c.l.b16 %v1902
        %v2251 = vunpack.c.h.b16 %v1902
        %v2252 = vunpack.c.l.b16 %v1903
        %v2253 = vunpack.c.h.b16 %v1903
        %v2254 = vunpack.c.l.b16 %v1904
        %v2255 = vunpack.c.h.b16 %v1904
        %v2256 = vunpack.c.l.b16 %v1905
        %v2257 = vunpack.c.h.b16 %v1905
        %v2258 = vunpack.c.l.b16 %v1906
        %v2259 = vunpack.c.h.b16 %v1906
        %v2260 = vunpack.c.l.b16 %v1907
        %v2261 = vunpack.c.h.b16 %v1907
        %v2262 = vunpack.c.l.b16 %v1908
        %v2263 = vunpack.c.h.b16 %v1908
        %v2264 = vunpack.c.l.b16 %v1909
        %v2265 = vunpack.c.h.b16 %v1909
        %v2266 = vunpack.c.l.b16 %v1910
        %v2267 = vunpack.c.h.b16 %v1910
        %v2268 = vunpack.c.l.b16 %v1911
        %v2269 = vunpack.c.h.b16 %v1911
        %v2270 = vunpack.c.l.b16 %v1912
        %v2271 = vunpack.c.h.b16 %v1912
        %v2272 = vunpack.c.l.b16 %v1913
        %v2273 = vunpack.c.h.b16 %v1913
        %v2274 = vunpack.c.l.b16 %v1914
        %v2275 = vunpack.c.h.b16 %v1914
        %v2276 = vunpack.c.l.b16 %v1915
        %v2277 = vunpack.c.h.b16 %v1915
        %v2278 = vunpack.c.l.b16 %v1916
        %v2279 = vunpack.c.h.b16 %v1916
        %v2280 = vunpack.c.l.b16 %v1917
        %v2281 = vunpack.c.h.b16 %v1917
        %v2282 = vunpack.c.l.b16 %v1918
        %v2283 = vunpack.c.h.b16 %v1918
        %v2284 = vunpack.c.l.b16 %v1919
        %v2285 = vunpack.c.h.b16 %v1919
        %v2286 = vunpack.c.l.b16 %v1920
        %v2287 = vunpack.c.h.b16 %v1920
        %v2288 = vunpack.c.l.b16 %v1921
        %v2289 = vunpack.c.h.b16 %v1921
        %v2290 = vunpack.c.l.b16 %v1922
        %v2291 = vunpack.c.h.b16 %v1922
        %v2292 = vunpack.c.l.b16 %v1923
        %v2293 = vunpack.c.h.b16 %v1923
        %v2294 = vunpack.c.l.b16 %v1924
        %v2295 = vunpack.c.h.b16 %v1924
        %v2296 = vunpack.c.l.b16 %v1925
        %v2297 = vunpack.c.h.b16 %v1925
        %v2298 = vunpack.c.l.b16 %v1926
        %v2299 = vunpack.c.h.b16 %v1926
        %v2300 = vunpack.c.l.b16 %v1927
        %v2301 = vunpack.c.h.b16 %v1927
        %v2302 = vunpack.c.l.b16 %v1928
        %v2303 = vunpack.c.h.b16 %v1928
        %v2304 = vunpack.c.l.b16 %v1929
        %v2305 = vunpack.c.h.b16 %v1929
        %v2306 = vunpack.c.l.b16 %v1930
        %v2307 = vunpack.c.h.b16 %v1930
        %v2308 = vunpack.c.l.b16 %v1931
        %v2309 = vunpack.c.h.b16 %v1931
        %v2310 = vunpack.c.l.b16 %v1932
        %v2311 = vunpack.c.h.b16 %v1932
        %v2312 = vunpack.c.l.b16 %v1933
        %v2313 = vunpack.c.h.b16 %v1933
        %v2314 = vunpack.c.l.b16 %v1934
        %v2315 = vunpack.c.h.b16 %v1934
        %v2316 = vunpack.c.l.b16 %v1935
        %v2317 = vunpack.c.h.b16 %v1935
        %v2318 = vunpack.c.l.b16 %v1936
        %v2319 = vunpack.c.h.b16 %v1936
        %v2320 = vunpack.c.l.b16 %v1937
        %v2321 = vunpack.c.h.b16 %v1937
        %v2322 = vunpack.c.l.b16 %v1938
        %v2323 = vunpack.c.h.b16 %v1938
        %v2324 = vunpack.c.l.b16 %v1939
        %v2325 = vunpack.c.h.b16 %v1939
        %v2326 = vunpack.c.l.b16 %v1940
        %v2327 = vunpack.c.h.b16 %v1940
        %v2328 = vunpack.c.l.b16 %v1941
        %v2329 = vunpack.c.h.b16 %v1941
        %v2330 = vunpack.c.l.b16 %v1942
        %v2331 = vunpack.c.h.b16 %v1942
        %v2332 = vunpack.c.l.b16 %v1943
        %v2333 = vunpack.c.h.b16 %v1943
        %v2334 = vunpack.c.l.b16 %v1944
        %v2335 = vunpack.c.h.b16 %v1944
        %v2336 = vunpack.c.l.b16 %v1945
        %v2337 = vunpack.c.h.b16 %v1945
        %v2338 = vunpack.c.l.b16 %v1946
        %v2339 = vunpack.c.h.b16 %v1946
        %v2340 = vunpack.c.l.b16 %v1947
        %v2341 = vunpack.c.h.b16 %v1947
        %v2342 = vunpack.c.l.b16 %v1948
        %v2343 = vunpack.c.h.b16 %v1948
        %v2344 = vunpack.c.l.b16 %v1949
        %v2345 = vunpack.c.h.b16 %v1949
        %v2346 = vunpack.c.l.b16 %v1950
        %v2347 = vunpack.c.h.b16 %v1950
        %v2348 = vunpack.c.l.b16 %v1951
        %v2349 = vunpack.c.h.b16 %v1951
        %v2350 = vunpack.c.l.b16 %v1952
        %v2351 = vunpack.c.h.b16 %v1952
        %v2352 = vunpack.c.l.b16 %v1953
        %v2353 = vunpack.c.h.b16 %v1953
        %v2354 = vunpack.c.l.b16 %v1954
        %v2355 = vunpack.c.h.b16 %v1954
        %v2356 = vunpack.c.l.b16 %v1955
        %v2357 = vunpack.c.h.b16 %v1955
        %v2358 = vunpack.c.l.b16 %v1956
        %v2359 = vunpack.c.h.b16 %v1956
        %v2360 = vunpack.c.l.b16 %v1957
        %v2361 = vunpack.c.h.b16 %v1957
        %v2362 = vunpack.c.l.b16 %v1958
        %v2363 = vunpack.c.h.b16 %v1958
        %v2364 = vunpack.c.l.b16 %v1959
        %v2365 = vunpack.c.h.b16 %v1959
        %v2366 = vunpack.c.l.b16 %v1960
        %v2367 = vunpack.c.h.b16 %v1960
        %v2368 = vunpack.c.l.b16 %v1961
        %v2369 = vunpack.c.h.b16 %v1961
        %v2370 = vunpack.c.l.b16 %v1962
        %v2371 = vunpack.c.h.b16 %v1962
        %v2372 = vunpack.c.l.b16 %v1963
        %v2373 = vunpack.c.h.b16 %v1963
        %v2374 = vunpack.c.l.b16 %v1964
        %v2375 = vunpack.c.h.b16 %v1964
        %v2376 = vunpack.c.l.b16 %v1965
        %v2377 = vunpack.c.h.b16 %v1965
        %v2378 = vunpack.c.l.b16 %v1966
        %v2379 = vunpack.c.h.b16 %v1966
        %v2380 = vunpack.c.l.b16 %v1967
        %v2381 = vunpack.c.h.b16 %v1967
        %v2382 = vunpack.c.l.b16 %v1968
        %v2383 = vunpack.c.h.b16 %v1968
        %v2384 = vunpack.c.l.b16 %v1969
        %v2385 = vunpack.c.h.b16 %v1969
        %v2386 = vunpack.c.l.b16 %v1970
        %v2387 = vunpack.c.h.b16 %v1970
        %v2388 = vunpack.c.l.b16 %v1971
        %v2389 = vunpack.c.h.b16 %v1971
        %v2390 = vunpack.c.l.b16 %v1972
        %v2391 = vunpack.c.h.b16 %v1972
        %v2392 = vunpack.c.l.b16 %v1973
        %v2393 = vunpack.c.h.b16 %v1973
        %v2394 = vpack.c.b16 %v2142, %v2138
        %v2395 = vpack.c.b16 %v2143, %v2139
        %v2396 = vpack.c.b16 %v2144, %v2140
        %v2397 = vpack.c.b16 %v2145, %v2141
        %v2398 = vpack.c.b16 %v2150, %v2146
        %v2399 = vpack.c.b16 %v2151, %v2147
        %v2400 = vpack.c.b16 %v2152, %v2148
        %v2401 = vpack.c.b16 %v2153, %v2149
        %v2402 = vpack.c.b16 %v2158, %v2154
        %v2403 = vpack.c.b16 %v2159, %v2155
        %v2404 = vpack.c.b16 %v2160, %v2156
        %v2405 = vpack.c.b16 %v2161, %v2157
        %v2406 = vpack.c.b16 %v2166, %v2162
        %v2407 = vpack.c.b16 %v2167, %v2163
        %v2408 = vpack.c.b16 %v2168, %v2164
        %v2409 = vpack.c.b16 %v2169, %v2165
        %v2410 = vpack.c.b16 %v2174, %v2170
        %v2411 = vpack.c.b16 %v2175, %v2171
        %v2412 = vpack.c.b16 %v2176, %v2172
        %v2413 = vpack.c.b16 %v2177, %v2173
        %v2414 = vpack.c.b16 %v2182, %v2178
        %v2415 = vpack.c.b16 %v2183, %v2179
        %v2416 = vpack.c.b16 %v2184, %v2180
        %v2417 = vpack.c.b16 %v2185, %v2181
        %v2418 = vpack.c.b16 %v2190, %v2186
        %v2419 = vpack.c.b16 %v2191, %v2187
        %v2420 = vpack.c.b16 %v2192, %v2188
        %v2421 = vpack.c.b16 %v2193, %v2189
        %v2422 = vpack.c.b16 %v2198, %v2194
        %v2423 = vpack.c.b16 %v2199, %v2195
        %v2424 = vpack.c.b16 %v2200, %v2196
        %v2425 = vpack.c.b16 %v2201, %v2197
        %v2426 = vpack.c.b16 %v2206, %v2202
        %v2427 = vpack.c.b16 %v2207, %v2203
        %v2428 = vpack.c.b16 %v2208, %v2204
        %v2429 = vpack.c.b16 %v2209, %v2205
        %v2430 = vpack.c.b16 %v2214, %v2210
        %v2431 = vpack.c.b16 %v2215, %v2211
        %v2432 = vpack.c.b16 %v2216, %v2212
        %v2433 = vpack.c.b16 %v2217, %v2213
        %v2434 = vpack.c.b16 %v2222, %v2218
        %v2435 = vpack.c.b16 %v2223, %v2219
        %v2436 = vpack.c.b16 %v2224, %v2220
        %v2437 = vpack.c.b16 %v2225, %v2221
        %v2438 = vpack.c.b16 %v2230, %v2226
        %v2439 = vpack.c.b16 %v2231, %v2227
        %v2440 = vpack.c.b16 %v2232, %v2228
        %v2441 = vpack.c.b16 %v2233, %v2229
        %v2442 = vpack.c.b16 %v2238, %v2234
        %v2443 = vpack.c.b16 %v2239, %v2235
        %v2444 = vpack.c.b16 %v2240, %v2236
        %v2445 = vpack.c.b16 %v2241, %v2237
        %v2446 = vpack.c.b16 %v2246, %v2242
        %v2447 = vpack.c.b16 %v2247, %v2243
        %v2448 = vpack.c.b16 %v2248, %v2244
        %v2449 = vpack.c.b16 %v2249, %v2245
        %v2450 = vpack.c.b16 %v2254, %v2250
        %v2451 = vpack.c.b16 %v2255, %v2251
        %v2452 = vpack.c.b16 %v2256, %v2252
        %v2453 = vpack.c.b16 %v2257, %v2253
        %v2454 = vpack.c.b16 %v2262, %v2258
        %v2455 = vpack.c.b16 %v2263, %v2259
        %v2456 = vpack.c.b16 %v2264, %v2260
        %v2457 = vpack.c.b16 %v2265, %v2261
        %v2458 = vpack.c.b16 %v2270, %v2266
        %v2459 = vpack.c.b16 %v2271, %v2267
        %v2460 = vpack.c.b16 %v2272, %v2268
        %v2461 = vpack.c.b16 %v2273, %v2269
        %v2462 = vpack.c.b16 %v2278, %v2274
        %v2463 = vpack.c.b16 %v2279, %v2275
        %v2464 = vpack.c.b16 %v2280, %v2276
        %v2465 = vpack.c.b16 %v2281, %v2277
        %v2466 = vpack.c.b16 %v2286, %v2282
        %v2467 = vpack.c.b16 %v2287, %v2283
        %v2468 = vpack.c.b16 %v2288, %v2284
        %v2469 = vpack.c.b16 %v2289, %v2285
        %v2470 = vpack.c.b16 %v2294, %v2290
        %v2471 = vpack.c.b16 %v2295, %v2291
        %v2472 = vpack.c.b16 %v2296, %v2292
        %v2473 = vpack.c.b16 %v2297, %v2293
        %v2474 = vpack.c.b16 %v2302, %v2298
        %v2475 = vpack.c.b16 %v2303, %v2299
        %v2476 = vpack.c.b16 %v2304, %v2300
        %v2477 = vpack.c.b16 %v2305, %v2301
        %v2478 = vpack.c.b16 %v2310, %v2306
        %v2479 = vpack.c.b16 %v2311, %v2307
        %v2480 = vpack.c.b16 %v2312, %v2308
        %v2481 = vpack.c.b16 %v2313, %v2309
        %v2482 = vpack.c.b16 %v2318, %v2314
        %v2483 = vpack.c.b16 %v2319, %v2315
        %v2484 = vpack.c.b16 %v2320, %v2316
        %v2485 = vpack.c.b16 %v2321, %v2317
        %v2486 = vpack.c.b16 %v2326, %v2322
        %v2487 = vpack.c.b16 %v2327, %v2323
        %v2488 = vpack.c.b16 %v2328, %v2324
        %v2489 = vpack.c.b16 %v2329, %v2325
        %v2490 = vpack.c.b16 %v2334, %v2330
        %v2491 = vpack.c.b16 %v2335, %v2331
        %v2492 = vpack.c.b16 %v2336, %v2332
        %v2493 = vpack.c.b16 %v2337, %v2333
        %v2494 = vpack.c.b16 %v2342, %v2338
        %v2495 = vpack.c.b16 %v2343, %v2339
        %v2496 = vpack.c.b16 %v2344, %v2340
        %v2497 = vpack.c.b16 %v2345, %v2341
        %v2498 = vpack.c.b16 %v2350, %v2346
        %v2499 = vpack.c.b16 %v2351, %v2347
        %v2500 = vpack.c.b16 %v2352, %v2348
        %v2501 = vpack.c.b16 %v2353, %v2349
        %v2502 = vpack.c.b16 %v2358, %v2354
        %v2503 = vpack.c.b16 %v2359, %v2355
        %v2504 = vpack.c.b16 %v2360, %v2356
        %v2505 = vpack.c.b16 %v2361, %v2357
        %v2506 = vpack.c.b16 %v2366, %v2362
        %v2507 = vpack.c.b16 %v2367, %v2363
        %v2508 = vpack.c.b16 %v2368, %v2364
        %v2509 = vpack.c.b16 %v2369, %v2365
        %v2510 = vpack.c.b16 %v2374, %v2370
        %v2511 = vpack.c.b16 %v2375, %v2371
        %v2512 = vpack.c.b16 %v2376, %v2372
        %v2513 = vpack.c.b16 %v2377, %v2373
        %v2514 = vpack.c.b16 %v2382, %v2378
        %v2515 = vpack.c.b16 %v2383, %v2379
        %v2516 = vpack.c.b16 %v2384, %v2380
        %v2517 = vpack.c.b16 %v2385, %v2381
        %v2518 = vpack.c.b16 %v2390, %v2386
        %v2519 = vpack.c.b16 %v2391, %v2387
        %v2520 = vpack.c.b16 %v2392, %v2388
        %v2521 = vpack.c.b16 %v2393, %v2389
        %2650 = vmatprep.subr.bf16.mxu0 %v2395
        %2651 = vmatpush1.bf16.msra.mxu0 %v2394
        %2652 = vmatprep.subr.bf16.mxu0 %v2399
        %2653 = vmatpush1.bf16.msra.mxu0 %v2398
        %2654 = vmatprep.subr.bf16.mxu0 %v2403
        %2655 = vmatpush1.bf16.msra.mxu0 %v2402
        %2656 = vmatprep.subr.bf16.mxu0 %v2407
        %2657 = vmatpush1.bf16.msra.mxu0 %v2406
        %2658 = vmatprep.subr.bf16.mxu0 %v2411
        %2659 = vmatpush1.bf16.msra.mxu0 %v2410
        %2660 = vmatprep.subr.bf16.mxu0 %v2415
        %2661 = vmatpush1.bf16.msra.mxu0 %v2414
        %2662 = vmatprep.subr.bf16.mxu0 %v2419
        %2663 = vmatpush1.bf16.msra.mxu0 %v2418
        %2664 = vmatprep.subr.bf16.mxu0 %v2423
        %2665 = vmatpush1.bf16.msra.mxu0 %v2422
        %2666 = vmatprep.subr.bf16.mxu0 %v2427
        %2667 = vmatpush1.bf16.msra.mxu0 %v2426
        %2668 = vmatprep.subr.bf16.mxu0 %v2431
        %2669 = vmatpush1.bf16.msra.mxu0 %v2430
        %2670 = vmatprep.subr.bf16.mxu0 %v2435
        %2671 = vmatpush1.bf16.msra.mxu0 %v2434
        %2672 = vmatprep.subr.bf16.mxu0 %v2439
        %2673 = vmatpush1.bf16.msra.mxu0 %v2438
        %2674 = vmatprep.subr.bf16.mxu0 %v2443
        %2675 = vmatpush1.bf16.msra.mxu0 %v2442
        %2676 = vmatprep.subr.bf16.mxu0 %v2447
        %2677 = vmatpush1.bf16.msra.mxu0 %v2446
        %2678 = vmatprep.subr.bf16.mxu0 %v2451
        %2679 = vmatpush1.bf16.msra.mxu0 %v2450
        %2680 = vmatprep.subr.bf16.mxu0 %v2455
        %2681 = vmatpush1.bf16.msra.mxu0 %v2454
        %2682 = vmatprep.mubr.bf16.mxu0 %v2003
        %2683 = vmatmul.mubr.bf16.gmra.mrb[0].mxu0 %v2002
        %v2684 = vpop.f32.mrb[0].mxu0
        %v2685 = vadd.f32 %v1979, %v2684
        %v2686 = vpop.f32.mrb[0].mxu0
        %v2687 = vadd.f32 %v1983, %v2686
        %v2688 = vpop.f32.mrb[0].mxu0
        %v2689 = vpop.f32.mrb[0].mxu0
        %2690 = vdwg.mxu0
        %2691 = vmatprep.subr.bf16.mxu0 %v2459
        %2692 = vmatpush1.bf16.msra.mxu0 %v2458
        %2693 = vmatprep.subr.bf16.mxu0 %v2463
        %2694 = vmatpush1.bf16.msra.mxu0 %v2462
        %2695 = vmatprep.subr.bf16.mxu0 %v2467
        %2696 = vmatpush1.bf16.msra.mxu0 %v2466
        %2697 = vmatprep.subr.bf16.mxu0 %v2471
        %2698 = vmatpush1.bf16.msra.mxu0 %v2470
        %2699 = vmatprep.subr.bf16.mxu0 %v2475
        %2700 = vmatpush1.bf16.msra.mxu0 %v2474
        %2701 = vmatprep.subr.bf16.mxu0 %v2479
        %2702 = vmatpush1.bf16.msra.mxu0 %v2478
        %2703 = vmatprep.subr.bf16.mxu0 %v2483
        %2704 = vmatpush1.bf16.msra.mxu0 %v2482
        %2705 = vmatprep.subr.bf16.mxu0 %v2487
        %2706 = vmatpush1.bf16.msra.mxu0 %v2486
        %2707 = vmatprep.subr.bf16.mxu0 %v2491
        %2708 = vmatpush1.bf16.msra.mxu0 %v2490
        %2709 = vmatprep.subr.bf16.mxu0 %v2495
        %2710 = vmatpush1.bf16.msra.mxu0 %v2494
        %2711 = vmatprep.subr.bf16.mxu0 %v2499
        %2712 = vmatpush1.bf16.msra.mxu0 %v2498
        %2713 = vmatprep.subr.bf16.mxu0 %v2503
        %2714 = vmatpush1.bf16.msra.mxu0 %v2502
        %2715 = vmatprep.subr.bf16.mxu0 %v2507
        %2716 = vmatpush1.bf16.msra.mxu0 %v2506
        %2717 = vmatprep.subr.bf16.mxu0 %v2511
        %2718 = vmatpush1.bf16.msra.mxu0 %v2510
        %2719 = vmatprep.subr.bf16.mxu0 %v2515
        %2720 = vmatpush1.bf16.msra.mxu0 %v2514
        %2721 = vmatprep.subr.bf16.mxu0 %v2519
        %2722 = vmatpush1.bf16.msra.mxu0 %v2518
        %2723 = vmatprep.mubr.bf16.mxu0 %v2005
        %2724 = vmatmul.mubr.bf16.gmra.mrb[0].mxu0 %v2004
        %v2725 = vpop.f32.mrb[0].mxu0
        %v2726 = vadd.f32 %v2685, %v2725
        %v2727 = vpop.f32.mrb[0].mxu0
        %v2728 = vadd.f32 %v2687, %v2727
        %v2729 = vpop.f32.mrb[0].mxu0
        %v2730 = vpop.f32.mrb[0].mxu0
        %2731 = vdwg.mxu0
        %2732 = vmatprep.subr.bf16.mxu0 %v2397
        %2733 = vmatpush1.bf16.msra.mxu0 %v2396
        %2734 = vmatprep.subr.bf16.mxu0 %v2401
        %2735 = vmatpush1.bf16.msra.mxu0 %v2400
        %2736 = vmatprep.subr.bf16.mxu0 %v2405
        %2737 = vmatpush1.bf16.msra.mxu0 %v2404
        %2738 = vmatprep.subr.bf16.mxu0 %v2409
        %2739 = vmatpush1.bf16.msra.mxu0 %v2408
        %2740 = vmatprep.subr.bf16.mxu0 %v2413
        %2741 = vmatpush1.bf16.msra.mxu0 %v2412
        %2742 = vmatprep.subr.bf16.mxu0 %v2417
        %2743 = vmatpush1.bf16.msra.mxu0 %v2416
        %2744 = vmatprep.subr.bf16.mxu0 %v2421
        %2745 = vmatpush1.bf16.msra.mxu0 %v2420
        %2746 = vmatprep.subr.bf16.mxu0 %v2425
        %2747 = vmatpush1.bf16.msra.mxu0 %v2424
        %2748 = vmatprep.subr.bf16.mxu0 %v2429
        %2749 = vmatpush1.bf16.msra.mxu0 %v2428
        %2750 = vmatprep.subr.bf16.mxu0 %v2433
        %2751 = vmatpush1.bf16.msra.mxu0 %v2432
        %2752 = vmatprep.subr.bf16.mxu0 %v2437
        %2753 = vmatpush1.bf16.msra.mxu0 %v2436
        %2754 = vmatprep.subr.bf16.mxu0 %v2441
        %2755 = vmatpush1.bf16.msra.mxu0 %v2440
        %2756 = vmatprep.subr.bf16.mxu0 %v2445
        %2757 = vmatpush1.bf16.msra.mxu0 %v2444
        %2758 = vmatprep.subr.bf16.mxu0 %v2449
        %2759 = vmatpush1.bf16.msra.mxu0 %v2448
        %2760 = vmatprep.subr.bf16.mxu0 %v2453
        %2761 = vmatpush1.bf16.msra.mxu0 %v2452
        %2762 = vmatprep.subr.bf16.mxu0 %v2457
        %2763 = vmatpush1.bf16.msra.mxu0 %v2456
        %2764 = vmatprep.mubr.bf16.mxu0 %v2003
        %2765 = vmatmul.mubr.bf16.gmra.mrb[0].mxu0 %v2002
        %v2766 = vpop.f32.mrb[0].mxu0
        %v2767 = vadd.f32 %v1987, %v2766
        %v2768 = vpop.f32.mrb[0].mxu0
        %v2769 = vadd.f32 %v1991, %v2768
        %v2770 = vpop.f32.mrb[0].mxu0
        %v2771 = vpop.f32.mrb[0].mxu0
        %2772 = vdwg.mxu0
        %2773 = vmatprep.subr.bf16.mxu0 %v2461
        %2774 = vmatpush1.bf16.msra.mxu0 %v2460
        %2775 = vmatprep.subr.bf16.mxu0 %v2465
        %2776 = vmatpush1.bf16.msra.mxu0 %v2464
        %2777 = vmatprep.subr.bf16.mxu0 %v2469
        %2778 = vmatpush1.bf16.msra.mxu0 %v2468
        %2779 = vmatprep.subr.bf16.mxu0 %v2473
        %2780 = vmatpush1.bf16.msra.mxu0 %v2472
        %2781 = vmatprep.subr.bf16.mxu0 %v2477
        %2782 = vmatpush1.bf16.msra.mxu0 %v2476
        %2783 = vmatprep.subr.bf16.mxu0 %v2481
        %2784 = vmatpush1.bf16.msra.mxu0 %v2480
        %2785 = vmatprep.subr.bf16.mxu0 %v2485
        %2786 = vmatpush1.bf16.msra.mxu0 %v2484
        %2787 = vmatprep.subr.bf16.mxu0 %v2489
        %2788 = vmatpush1.bf16.msra.mxu0 %v2488
        %2789 = vmatprep.subr.bf16.mxu0 %v2493
        %2790 = vmatpush1.bf16.msra.mxu0 %v2492
        %2791 = vmatprep.subr.bf16.mxu0 %v2497
        %2792 = vmatpush1.bf16.msra.mxu0 %v2496
        %2793 = vmatprep.subr.bf16.mxu0 %v2501
        %2794 = vmatpush1.bf16.msra.mxu0 %v2500
        %2795 = vmatprep.subr.bf16.mxu0 %v2505
        %2796 = vmatpush1.bf16.msra.mxu0 %v2504
        %2797 = vmatprep.subr.bf16.mxu0 %v2509
        %2798 = vmatpush1.bf16.msra.mxu0 %v2508
        %2799 = vmatprep.subr.bf16.mxu0 %v2513
        %2800 = vmatpush1.bf16.msra.mxu0 %v2512
        %2801 = vmatprep.subr.bf16.mxu0 %v2517
        %2802 = vmatpush1.bf16.msra.mxu0 %v2516
        %2803 = vmatprep.subr.bf16.mxu0 %v2521
        %2804 = vmatpush1.bf16.msra.mxu0 %v2520
        %2805 = vmatprep.mubr.bf16.mxu0 %v2005
        %2806 = vmatmul.mubr.bf16.gmra.mrb[0].mxu0 %v2004
        %v2807 = vpop.f32.mrb[0].mxu0
        %v2808 = vadd.f32 %v2767, %v2807
        %v2809 = vpop.f32.mrb[0].mxu0
        %v2810 = vadd.f32 %v2769, %v2809
        %v2811 = vpop.f32.mrb[0].mxu0
        %v2812 = vpop.f32.mrb[0].mxu0
        %2813 = vdwg.mxu0
        %2814 = vst [vmem:[%s421] sm:$0xff] %v2726
        %2815 = vst [vmem:[%s421 + $0x8] sm:$0xff] %v2728
        %2816 = vst [vmem:[%s421 + $0x10] sm:$0xff] %v2808
        %2817 = vst [vmem:[%s421 + $0x18] sm:$0xff] %v2810
        %s2818 = sand.u32 %s199, 1
        %s2819 = scalar_lea.sflag [#allocation7], %s2818
        %s2820 = sand.u32 %s199, 1
        %s2821 = smul.addr %s2820, 32
        %s2822 = scalar_lea.vmem [#allocation17], %s2821
        // Predicated region
        $region77: #{tpu_custom_call.1} parent=47 // pred_check
          %p2823 = pneg %p209
        $region78: #{tpu_custom_call.1} parent=47 // pred_check_branch
          %2825 = sbr.rel (%p2823) target = $region80
        $region79: #{tpu_custom_call.1} parent=47 // pred_region
          %s2827 = ssub.s32 512, 512
          %2828 = vsyncadd %s2819, %s2827
          %s2829 = smul.addr %s29, 4
          %s2830 = smul.addr %s2829, 128
          %s2831 = scalar_lea.hbm %s7, %s2830
          %s2833 = sshll.u32 %s2822, 4
          %s2834 = int_to_ptr.vmem [resolvable:$true] %s2833
          %2836 = dma.vmem_to_hbm [thread:$0]  %s2834, 512, %s2831, %s2819
        $region80: #{tpu_custom_call.1} parent=47 // pred_fallthru
          _
      $region48: #{tpu_custom_call.1} parent=5 // pred_fallthru
        _
      %p2837 = scmp.le.s32.totalorder 2, %s24
      // Predicated region
      $region81: #{tpu_custom_call.1} parent=5 // pred_check
        %p2838 = pneg %p2837
      $region82: #{tpu_custom_call.1} parent=5 // pred_check_branch
        %2840 = sbr.rel (%p2838) target = $region84
      $region83: #{tpu_custom_call.1} parent=5 // pred_region
        %s2841 = ssub.s32 %s24, 2
        // Predicated region
        $region85: #{tpu_custom_call.1} parent=83 // pred_check
          %p2842 = pneg %p215
        $region86: #{tpu_custom_call.1} parent=83 // pred_check_branch
          %2844 = sbr.rel (%p2842) target = $region88
        $region87: #{tpu_custom_call.1} parent=83 // pred_region
          %s2845 = sand.u32 %s200, 1
          %s2846 = scalar_lea.sflag [#allocation7], %s2845
          %s2847 = sand.u32 %s200, 1
          %s2848 = smul.addr %s2847, 32
          %s2849 = scalar_lea.vmem [#allocation17], %s2848
          %2850 = dma.done %s2846, 512
        $region88: #{tpu_custom_call.1} parent=83 // pred_fallthru
          _
      $region84: #{tpu_custom_call.1} parent=5 // pred_fallthru
        _
    $region6: #{tpu_custom_call.1} parent=1 // loop_footer
      %s28 = sadd.s32 1, %s24
    $region7: #{tpu_custom_call.1} parent=1 // loop_footer_branch
      %23 = sbr.rel target = $region3
    $region8: #{tpu_custom_call.1} parent=1 // loop_exit
      _
    %2851 = vsyncpa [#allocation6], 1
    %s2852 = scalar_lea.sflag [#allocation6], 1
    %2853 = vsyncpa %s2852, 1
    %2854 = vsyncpa [#allocation9], 1
    %s2855 = scalar_lea.sflag [#allocation9], 1
    %2856 = vsyncpa %s2855, 1
    %2857 = vsyncpa [#allocation12], 1
    %2858 = vsyncpa [#allocation15], 1
    %2859 = vsyncpa [#allocation7], 1
    %s2860 = scalar_lea.sflag [#allocation7], 1
    %2861 = vsyncpa %s2860, 1

</llo_original>
